<compile_context>
chip_gen: v7x
topology: tpu7x:2x2x1
jax: 0.10.0
libtpu: 0.0.40
codegen_flags: <defaults>
</compile_context>

<pallas_src>
import numpy as np
import jax
import jax.numpy as jnp
from jax.experimental import pallas as pl
from jax.experimental.pallas import tpu as pltpu

IGNORE_INDEX = -100
PAD_VALUE = 0
NEG_BIG = -1e30   # safe in f32; padded-vocab lanes never win the softmax

FIELDS = ('type', 'beat', 'position', 'pitch', 'duration', 'instrument',
          'timesignaturenumerator', 'timesignaturedenominator', 'tempo')
VOCAB = {'type': 5, 'beat': 9, 'position': 13, 'pitch': 17, 'duration': 21,
         'instrument': 7, 'timesignaturenumerator': 6,
         'timesignaturedenominator': 6, 'tempo': 8}
D = 32              # hidden width
V_PAD = 128         # each field's vocab padded to one lane-width tile
VSUM_PAD = 128      # stacked (offsetted) embedding table padded to one lane tile
PROMPT_VOCAB = 11   # prompt input token vocab
ATTR_CLASSES = 10   # prompt/attribute output classes


# ----------------------------- Pallas kernel -------------------------------

def _make_fused_kernel(nf):
    """Fully fused forward + per-field CE reduction for `nf` token fields."""
    def kernel(tok_ref, tgt_ref, valid_ref, embt_ref, w1_ref, b1_ref,
               wh_ref, bh_ref, out_ref):
        f32 = jnp.float32
        n = tok_ref.shape[0]
        vsum = embt_ref.shape[0]

        # --- embedding sum as one multi-hot MXU matmul (no XLA gathers) ---
        # tokens are pre-offset into the stacked table, so the multi-hot row
        # picks exactly one row per field and the matmul sums them.
        tok = tok_ref[...]                                         # (n, nf) i32
        vcol = jax.lax.broadcasted_iota(jnp.int32, (n, vsum), 1)
        mh = jnp.zeros((n, vsum), f32)
        for i in range(nf):
            mh = mh + (vcol == tok[:, i:i + 1]).astype(f32)
        e = jnp.dot(mh, embt_ref[...], preferred_element_type=f32)  # (n, D)

        # --- hidden layer (stays in VMEM) ---
        h = jnp.tanh(jnp.dot(e, w1_ref[...], preferred_element_type=f32)
                     + b1_ref[...])                                 # (n, D)

        # --- all heads in one lane-dense matmul ---
        logits = (jnp.dot(h, wh_ref[...], preferred_element_type=f32)
                  + bh_ref[...])                                    # (n, nf*128)

        # --- per-field CE (ignore_index mask), reduced in-kernel ---
        tgt = tgt_ref[...]                                          # (n, nf) i32
        valid = valid_ref[...]                                      # (n, nf) f32
        col = jax.lax.broadcasted_iota(jnp.int32, (n, V_PAD), 1)    # hoisted once
        sub = jax.lax.broadcasted_iota(jnp.int32, (8, 128), 0)
        lane = jax.lax.broadcasted_iota(jnp.int32, (8, 128), 1)
        acc = jnp.zeros((8, 128), f32)
        for i in range(nf):
            seg = logits[:, i * V_PAD:(i + 1) * V_PAD]   # static vreg-aligned slice
            m = jnp.max(seg, axis=-1, keepdims=True)
            lse = m + jnp.log(jnp.sum(jnp.exp(seg - m), axis=-1, keepdims=True))
            tl = jnp.sum(jnp.where(col == tgt[:, i:i + 1], seg, 0.0),
                         axis=-1, keepdims=True)
            v = valid[:, i:i + 1]
            nll_sum = jnp.sum((lse - tl) * v)
            cnt = jnp.sum(v)
            acc = jnp.where((sub == 0) & (lane == i), nll_sum, acc)
            acc = jnp.where((sub == 1) & (lane == i), cnt, acc)
        out_ref[...] = acc                                          # lane-dense store
    return kernel


def pallas_fused_loss(tok, tgt, valid, embt, w1, b1, wh, bh, nf):
    """One pallas_call: embeddings -> hidden -> all heads -> per-field loss stats.

    Returns an (8, 128) tile: row 0 = per-field sum(nll*valid), row 1 = sum(valid).
    """
    # TODO(synk): when B*T grows, tile the row axis with grid=(n//TN,) and
    # dimension_semantics=("parallel",) (keeps the fused logits block under
    # v7x's 64 MiB VMEM); at the current toy size a single block is optimal.
    n = tok.shape[0]
    vsum, d = embt.shape
    hv = wh.shape[1]
    full = lambda i: (0, 0)
    return pl.pallas_call(
        _make_fused_kernel(nf),
        out_shape=jax.ShapeDtypeStruct((8, 128), jnp.float32),
        grid=(1,),
        in_specs=[pl.BlockSpec((n, nf), full),      # offsetted input tokens
                  pl.BlockSpec((n, nf), full),      # targets (ignore -> 0)
                  pl.BlockSpec((n, nf), full),      # valid mask (f32)
                  pl.BlockSpec((vsum, d), full),    # stacked embedding table
                  pl.BlockSpec((d, d), full),       # W1
                  pl.BlockSpec((1, d), full),       # b1
                  pl.BlockSpec((d, hv), full),      # concatenated heads
                  pl.BlockSpec((1, hv), full)],     # concatenated biases
        out_specs=pl.BlockSpec((8, 128), full),
        compiler_params=pltpu.CompilerParams(dimension_semantics=("arbitrary",)),
    )(tok, tgt, valid, embt, w1, b1, wh, bh)


# ----------------------------- parameters ----------------------------------

def init_params(key):
    keys = jax.random.split(key, 6)
    emb, heads = [], []
    for i, f in enumerate(FIELDS):
        v = VOCAB[f]
        ke = jax.random.fold_in(keys[0], i)
        kh = jax.random.fold_in(keys[1], i)
        emb.append(0.02 * jax.random.normal(ke, (v, D), jnp.float32))
        w = 0.1 * jax.random.normal(kh, (D, v), jnp.float32)
        b = jnp.zeros((v,), jnp.float32)
        heads.append((w, b))
    w1 = 0.1 * jax.random.normal(keys[2], (D, D), jnp.float32)
    b1 = jnp.zeros((1, D), jnp.float32)
    emb_p = 0.02 * jax.random.normal(keys[3], (PROMPT_VOCAB, D), jnp.float32)
    wp = 0.1 * jax.random.normal(keys[4], (D, D), jnp.float32)
    bp = jnp.zeros((1, D), jnp.float32)
    whp = 0.1 * jax.random.normal(keys[5], (D, ATTR_CLASSES), jnp.float32)
    bhp = jnp.zeros((ATTR_CLASSES,), jnp.float32)

    # ---- fused / padded forms consumed by the Pallas kernel ----
    sizes = [VOCAB[f] for f in FIELDS]
    offsets = np.concatenate([[0], np.cumsum(sizes)[:-1]]).astype(np.int32)
    emb_cat = jnp.concatenate(emb, axis=0)                     # (sum(V), D)
    emb_stacked = jnp.pad(emb_cat, ((0, VSUM_PAD - emb_cat.shape[0]), (0, 0)))
    wh_cat = jnp.concatenate(
        [jnp.pad(w, ((0, 0), (0, V_PAD - w.shape[1]))) for w, _ in heads], axis=1)
    bh_cat = jnp.concatenate(
        [jnp.pad(b, (0, V_PAD - b.shape[0]), constant_values=NEG_BIG)
         for _, b in heads]).reshape(1, -1)
    emb_p_pad = jnp.pad(emb_p, ((0, VSUM_PAD - PROMPT_VOCAB), (0, 0)))
    whp_pad = jnp.pad(whp, ((0, 0), (0, V_PAD - ATTR_CLASSES)))
    bhp_pad = jnp.pad(bhp, (0, V_PAD - ATTR_CLASSES),
                      constant_values=NEG_BIG).reshape(1, -1)

    return dict(emb=emb, heads=heads, w1=w1, b1=b1,
                emb_p=emb_p, wp=wp, bp=bp, headp=(whp, bhp),
                emb_offsets=jnp.asarray(offsets),
                emb_stacked=emb_stacked, wh_cat=wh_cat, bh_cat=bh_cat,
                emb_p_pad=emb_p_pad, whp_pad=whp_pad, bhp_pad=bhp_pad)


# ----------------------------- forward pass --------------------------------

def _round8(n):
    return ((n + 7) // 8) * 8


def _pad_rows(a, n_pad):
    return jnp.pad(a, ((0, n_pad - a.shape[0]), (0, 0)))


def music_autoregressive_forward(params, x, prompt, attribute, return_list=False):
    """Pallas implementation of MusicAutoregressiveWrapper.forward."""
    B, T, ndim = x.shape
    xi, xo = x[:, :-1], x[:, 1:]
    n = B * (T - 1)
    n_pad = _round8(n)

    # main branch: one fused pallas_call
    tok = xi.reshape(n, ndim).astype(jnp.int32) + params['emb_offsets'][None, :]
    tgt_raw = xo.reshape(n, ndim).astype(jnp.int32)
    valid = (tgt_raw != IGNORE_INDEX).astype(jnp.float32)
    tgt = jnp.where(tgt_raw == IGNORE_INDEX, 0, tgt_raw)
    tok, tgt, valid = (_pad_rows(a, n_pad) for a in (tok, tgt, valid))

    stats = pallas_fused_loss(tok, tgt, valid, params['emb_stacked'],
                              params['w1'], params['b1'],
                              params['wh_cat'], params['bh_cat'], ndim)
    # per-field mean NLL == F.cross_entropy(..., ignore_index=-100, reduction='mean')
    # (NaN if every target of a field is ignored -- matches PyTorch behavior)
    field_losses = stats[0, :ndim] / stats[1, :ndim]
    loss = jnp.sum(field_losses)

    # prompt branch (net.prompt_enable == True): second fused pallas_call
    pi, at = prompt[:, :-1], attribute[:, :-1]
    npr = pi.size
    npr_pad = _round8(npr)
    tokp = _pad_rows(pi.reshape(npr, 1).astype(jnp.int32), npr_pad)
    tgtp = _pad_rows(at.reshape(npr, 1).astype(jnp.int32), npr_pad)
    validp = _pad_rows(jnp.ones((npr, 1), jnp.float32), npr_pad)
    pstats = pallas_fused_loss(tokp, tgtp, validp, params['emb_p_pad'],
                               params['wp'], params['bp'],
                               params['whp_pad'], params['bhp_pad'], 1)
    loss_prompt = pstats[0, 0] / pstats[1, 0]
    loss = loss + loss_prompt

    if return_list:
        losses = [field_losses[i] for i in range(ndim)] + [loss_prompt]
        return loss, losses
    return loss

# TODO(synk): `generate()` (multinomial sampling, top_k/top_p filtering, python
# per-sample branching on event type codes) is data-dependent host-side control
# flow and is not implemented as a Pallas kernel.


# ----------------------------- pure-JAX reference --------------------------

def _ce_ref(logits, tgt, valid):
    lse = jax.scipy.special.logsumexp(logits, axis=-1)
    tl = jnp.take_along_axis(logits, tgt[:, None], axis=-1)[:, 0]
    return jnp.sum((lse - tl) * valid) / jnp.sum(valid)


def forward_ref(params, x, prompt, attribute):
    B, T, ndim = x.shape
    xi, xo = x[:, :-1], x[:, 1:]
    e = sum(params['emb'][i][xi[..., i]] for i in range(ndim))
    h = jnp.tanh(e.reshape(-1, D) @ params['w1'] + params['b1'])
    loss = 0.0
    for i in range(ndim):
        w, b = params['heads'][i]
        logits = h @ w + b
        tgt = xo[..., i].reshape(-1).astype(jnp.int32)
        valid = (tgt != IGNORE_INDEX).astype(jnp.float32)
        tgt = jnp.where(tgt == IGNORE_INDEX, 0, tgt)
        loss = loss + _ce_ref(logits, tgt, valid)
    pi, at = prompt[:, :-1], attribute[:, :-1]
    hp = jnp.tanh(params['emb_p'][pi].reshape(-1, D) @ params['wp'] + params['bp'])
    wph, bph = params['headp']
    logits_p = hp @ wph + bph
    loss = loss + _ce_ref(logits_p, at.reshape(-1).astype(jnp.int32),
                          jnp.ones((at.size,), jnp.float32))
    return loss


# ----------------------------- main -----------------------------------------

if __name__ == "__main__":
    params = init_params(jax.random.PRNGKey(0))

    B, T, Tp = 2, 8, 8
    kx, kp, ka = jax.random.split(jax.random.PRNGKey(1), 3)
    x = jnp.stack(
        [jax.random.randint(jax.random.fold_in(kx, i), (B, T), 0, VOCAB[f])
         for i, f in enumerate(FIELDS)], axis=-1).astype(jnp.int32)       # (2, 8, 9)
    prompt = jax.random.randint(kp, (B, Tp), 0, PROMPT_VOCAB).astype(jnp.int32)
    attribute = jax.random.randint(ka, (B, Tp), 0, ATTR_CLASSES).astype(jnp.int32)

    loss, losses = music_autoregressive_forward(params, x, prompt, attribute,
                                                return_list=True)
    loss = jax.block_until_ready(loss)

    loss_ref = forward_ref(params, x, prompt, attribute)
    assert np.allclose(float(loss), float(loss_ref), rtol=1e-4, atol=1e-4), \
        (float(loss), float(loss_ref))
    assert len(losses) == len(FIELDS) + 1

    print("KERNEL_OK")
</pallas_src>

<mosaic_0001>
module attributes {stable_mosaic.version = 11 : i64} {
  func.func @kernel(%arg0: i32, %arg1: memref<16x9xi32, #tpu.memory_space<vmem>>, %arg2: memref<16x9xi32, #tpu.memory_space<vmem>>, %arg3: memref<16x9xf32, #tpu.memory_space<vmem>>, %arg4: memref<128x32xf32, #tpu.memory_space<vmem>>, %arg5: memref<32x32xf32, #tpu.memory_space<vmem>>, %arg6: memref<1x32xf32, #tpu.memory_space<vmem>>, %arg7: memref<32x1152xf32, #tpu.memory_space<vmem>>, %arg8: memref<1x1152xf32, #tpu.memory_space<vmem>>, %arg9: memref<8x128xf32, #tpu.memory_space<vmem>>) attributes {dimension_semantics = [#tpu.dimension_semantics<arbitrary>], iteration_bounds = array<i64: 1>, scalar_prefetch = 0 : i64, scratch_operands = 0 : i64, tpu.core_type = #tpu.core_type<tc>, window_params = [{pipeline_mode = #tpu.pipeline_mode<synchronous>, transform_indices = @transform_0, window_bounds = array<i64: 16, 9>}, {pipeline_mode = #tpu.pipeline_mode<synchronous>, transform_indices = @transform_1, window_bounds = array<i64: 16, 9>}, {pipeline_mode = #tpu.pipeline_mode<synchronous>, transform_indices = @transform_2, window_bounds = array<i64: 16, 9>}, {pipeline_mode = #tpu.pipeline_mode<synchronous>, transform_indices = @transform_3, window_bounds = array<i64: 128, 32>}, {pipeline_mode = #tpu.pipeline_mode<synchronous>, transform_indices = @transform_4, window_bounds = array<i64: 32, 32>}, {pipeline_mode = #tpu.pipeline_mode<synchronous>, transform_indices = @transform_5, window_bounds = array<i64: 1, 32>}, {pipeline_mode = #tpu.pipeline_mode<synchronous>, transform_indices = @transform_6, window_bounds = array<i64: 32, 1152>}, {pipeline_mode = #tpu.pipeline_mode<synchronous>, transform_indices = @transform_7, window_bounds = array<i64: 1, 1152>}, {pipeline_mode = #tpu.pipeline_mode<synchronous>, transform_indices = @transform_8, window_bounds = array<i64: 8, 128>}]} {
    %c0 = arith.constant 0 : index
    %c0_0 = arith.constant 0 : index
    %0 = vector.load %arg1[%c0, %c0_0] : memref<16x9xi32, #tpu.memory_space<vmem>>, vector<16x9xi32>
    %1 = tpu.iota {dimensions = array<i32: 1>} : vector<16x128xi32>
    %cst = arith.constant 0.000000e+00 : f32
    %2 = vector.broadcast %cst : f32 to vector<16x128xf32>
    %3 = vector.extract_strided_slice %0 {offsets = [0, 0], sizes = [16, 1], strides = [1, 1]} : vector<16x9xi32> to vector<16x1xi32>
    %4 = vector.broadcast %3 : vector<16x1xi32> to vector<16x128xi32>
    %5 = arith.cmpi eq, %1, %4 : vector<16x128xi32>
    %6 = arith.extui %5 : vector<16x128xi1> to vector<16x128xi32>
    %7 = arith.sitofp %6 : vector<16x128xi32> to vector<16x128xf32>
    %8 = arith.addf %2, %7 : vector<16x128xf32>
    %9 = vector.extract_strided_slice %0 {offsets = [0, 1], sizes = [16, 1], strides = [1, 1]} : vector<16x9xi32> to vector<16x1xi32>
    %10 = vector.broadcast %9 : vector<16x1xi32> to vector<16x128xi32>
    %11 = arith.cmpi eq, %1, %10 : vector<16x128xi32>
    %12 = arith.extui %11 : vector<16x128xi1> to vector<16x128xi32>
    %13 = arith.sitofp %12 : vector<16x128xi32> to vector<16x128xf32>
    %14 = arith.addf %8, %13 : vector<16x128xf32>
    %15 = vector.extract_strided_slice %0 {offsets = [0, 2], sizes = [16, 1], strides = [1, 1]} : vector<16x9xi32> to vector<16x1xi32>
    %16 = vector.broadcast %15 : vector<16x1xi32> to vector<16x128xi32>
    %17 = arith.cmpi eq, %1, %16 : vector<16x128xi32>
    %18 = arith.extui %17 : vector<16x128xi1> to vector<16x128xi32>
    %19 = arith.sitofp %18 : vector<16x128xi32> to vector<16x128xf32>
    %20 = arith.addf %14, %19 : vector<16x128xf32>
    %21 = vector.extract_strided_slice %0 {offsets = [0, 3], sizes = [16, 1], strides = [1, 1]} : vector<16x9xi32> to vector<16x1xi32>
    %22 = vector.broadcast %21 : vector<16x1xi32> to vector<16x128xi32>
    %23 = arith.cmpi eq, %1, %22 : vector<16x128xi32>
    %24 = arith.extui %23 : vector<16x128xi1> to vector<16x128xi32>
    %25 = arith.sitofp %24 : vector<16x128xi32> to vector<16x128xf32>
    %26 = arith.addf %20, %25 : vector<16x128xf32>
    %27 = vector.extract_strided_slice %0 {offsets = [0, 4], sizes = [16, 1], strides = [1, 1]} : vector<16x9xi32> to vector<16x1xi32>
    %28 = vector.broadcast %27 : vector<16x1xi32> to vector<16x128xi32>
    %29 = arith.cmpi eq, %1, %28 : vector<16x128xi32>
    %30 = arith.extui %29 : vector<16x128xi1> to vector<16x128xi32>
    %31 = arith.sitofp %30 : vector<16x128xi32> to vector<16x128xf32>
    %32 = arith.addf %26, %31 : vector<16x128xf32>
    %33 = vector.extract_strided_slice %0 {offsets = [0, 5], sizes = [16, 1], strides = [1, 1]} : vector<16x9xi32> to vector<16x1xi32>
    %34 = vector.broadcast %33 : vector<16x1xi32> to vector<16x128xi32>
    %35 = arith.cmpi eq, %1, %34 : vector<16x128xi32>
    %36 = arith.extui %35 : vector<16x128xi1> to vector<16x128xi32>
    %37 = arith.sitofp %36 : vector<16x128xi32> to vector<16x128xf32>
    %38 = arith.addf %32, %37 : vector<16x128xf32>
    %39 = vector.extract_strided_slice %0 {offsets = [0, 6], sizes = [16, 1], strides = [1, 1]} : vector<16x9xi32> to vector<16x1xi32>
    %40 = vector.broadcast %39 : vector<16x1xi32> to vector<16x128xi32>
    %41 = arith.cmpi eq, %1, %40 : vector<16x128xi32>
    %42 = arith.extui %41 : vector<16x128xi1> to vector<16x128xi32>
    %43 = arith.sitofp %42 : vector<16x128xi32> to vector<16x128xf32>
    %44 = arith.addf %38, %43 : vector<16x128xf32>
    %45 = vector.extract_strided_slice %0 {offsets = [0, 7], sizes = [16, 1], strides = [1, 1]} : vector<16x9xi32> to vector<16x1xi32>
    %46 = vector.broadcast %45 : vector<16x1xi32> to vector<16x128xi32>
    %47 = arith.cmpi eq, %1, %46 : vector<16x128xi32>
    %48 = arith.extui %47 : vector<16x128xi1> to vector<16x128xi32>
    %49 = arith.sitofp %48 : vector<16x128xi32> to vector<16x128xf32>
    %50 = arith.addf %44, %49 : vector<16x128xf32>
    %51 = vector.extract_strided_slice %0 {offsets = [0, 8], sizes = [16, 1], strides = [1, 1]} : vector<16x9xi32> to vector<16x1xi32>
    %52 = vector.broadcast %51 : vector<16x1xi32> to vector<16x128xi32>
    %53 = arith.cmpi eq, %1, %52 : vector<16x128xi32>
    %54 = arith.extui %53 : vector<16x128xi1> to vector<16x128xi32>
    %55 = arith.sitofp %54 : vector<16x128xi32> to vector<16x128xf32>
    %56 = arith.addf %50, %55 : vector<16x128xf32>
    %c0_1 = arith.constant 0 : index
    %c0_2 = arith.constant 0 : index
    %57 = vector.load %arg4[%c0_1, %c0_2] : memref<128x32xf32, #tpu.memory_space<vmem>>, vector<128x32xf32>
    %cst_3 = arith.constant dense<0.000000e+00> : vector<16x32xf32>
    %58 = tpu.matmul %56, %57, %cst_3 {dimension_numbers = #tpu.dot_dimension_numbers<[1], [0], [0], [1], [0, 0, 1, 1], [], []>} : vector<16x128xf32>, vector<128x32xf32>, vector<16x32xf32> -> vector<16x32xf32>
    %c0_4 = arith.constant 0 : index
    %c0_5 = arith.constant 0 : index
    %59 = vector.load %arg5[%c0_4, %c0_5] : memref<32x32xf32, #tpu.memory_space<vmem>>, vector<32x32xf32>
    %cst_6 = arith.constant dense<0.000000e+00> : vector<16x32xf32>
    %60 = tpu.matmul %58, %59, %cst_6 {dimension_numbers = #tpu.dot_dimension_numbers<[1], [0], [0], [1], [0, 0, 1, 1], [], []>} : vector<16x32xf32>, vector<32x32xf32>, vector<16x32xf32> -> vector<16x32xf32>
    %c0_7 = arith.constant 0 : index
    %c0_8 = arith.constant 0 : index
    %61 = vector.load %arg6[%c0_7, %c0_8] : memref<1x32xf32, #tpu.memory_space<vmem>>, vector<1x32xf32>
    %62 = vector.broadcast %61 : vector<1x32xf32> to vector<16x32xf32>
    %63 = arith.addf %60, %62 : vector<16x32xf32>
    %64 = math.tanh %63 : vector<16x32xf32>
    %c0_9 = arith.constant 0 : index
    %c0_10 = arith.constant 0 : index
    %65 = vector.load %arg7[%c0_9, %c0_10] : memref<32x1152xf32, #tpu.memory_space<vmem>>, vector<32x1152xf32>
    %cst_11 = arith.constant dense<0.000000e+00> : vector<16x1152xf32>
    %66 = tpu.matmul %64, %65, %cst_11 {dimension_numbers = #tpu.dot_dimension_numbers<[1], [0], [0], [1], [0, 0, 1, 1], [], []>} : vector<16x32xf32>, vector<32x1152xf32>, vector<16x1152xf32> -> vector<16x1152xf32>
    %c0_12 = arith.constant 0 : index
    %c0_13 = arith.constant 0 : index
    %67 = vector.load %arg8[%c0_12, %c0_13] : memref<1x1152xf32, #tpu.memory_space<vmem>>, vector<1x1152xf32>
    %68 = vector.broadcast %67 : vector<1x1152xf32> to vector<16x1152xf32>
    %69 = arith.addf %66, %68 : vector<16x1152xf32>
    %c0_14 = arith.constant 0 : index
    %c0_15 = arith.constant 0 : index
    %70 = vector.load %arg2[%c0_14, %c0_15] : memref<16x9xi32, #tpu.memory_space<vmem>>, vector<16x9xi32>
    %c0_16 = arith.constant 0 : index
    %c0_17 = arith.constant 0 : index
    %71 = vector.load %arg3[%c0_16, %c0_17] : memref<16x9xf32, #tpu.memory_space<vmem>>, vector<16x9xf32>
    %72 = tpu.iota {dimensions = array<i32: 1>} : vector<16x128xi32>
    %73 = tpu.iota {dimensions = array<i32: 0>} : vector<8x128xi32>
    %74 = tpu.iota {dimensions = array<i32: 1>} : vector<8x128xi32>
    %cst_18 = arith.constant 0.000000e+00 : f32
    %75 = vector.broadcast %cst_18 : f32 to vector<8x128xf32>
    %76 = vector.extract_strided_slice %69 {offsets = [0, 0], sizes = [16, 128], strides = [1, 1]} : vector<16x1152xf32> to vector<16x128xf32>
    %cst_19 = arith.constant dense<0xFF800000> : vector<16xf32>
    %77 = vector.multi_reduction <maximumf>, %76, %cst_19 [1] : vector<16x128xf32> to vector<16xf32>
    %78 = vector.shape_cast %77 : vector<16xf32> to vector<16x1xf32>
    %79 = vector.broadcast %78 : vector<16x1xf32> to vector<16x128xf32>
    %80 = arith.subf %76, %79 : vector<16x128xf32>
    %81 = math.exp %80 : vector<16x128xf32>
    %cst_20 = arith.constant dense<0.000000e+00> : vector<16xf32>
    %82 = vector.multi_reduction <add>, %81, %cst_20 [1] : vector<16x128xf32> to vector<16xf32>
    %83 = vector.shape_cast %82 : vector<16xf32> to vector<16x1xf32>
    %84 = math.log %83 : vector<16x1xf32>
    %85 = arith.addf %78, %84 : vector<16x1xf32>
    %86 = vector.extract_strided_slice %70 {offsets = [0, 0], sizes = [16, 1], strides = [1, 1]} : vector<16x9xi32> to vector<16x1xi32>
    %87 = vector.broadcast %86 : vector<16x1xi32> to vector<16x128xi32>
    %88 = arith.cmpi eq, %72, %87 : vector<16x128xi32>
    %cst_21 = arith.constant 0.000000e+00 : f32
    %89 = vector.broadcast %cst_21 : f32 to vector<16x128xf32>
    %90 = arith.select %88, %76, %89 : vector<16x128xi1>, vector<16x128xf32>
    %cst_22 = arith.constant dense<0.000000e+00> : vector<16xf32>
    %91 = vector.multi_reduction <add>, %90, %cst_22 [1] : vector<16x128xf32> to vector<16xf32>
    %92 = vector.shape_cast %91 : vector<16xf32> to vector<16x1xf32>
    %93 = vector.extract_strided_slice %71 {offsets = [0, 0], sizes = [16, 1], strides = [1, 1]} : vector<16x9xf32> to vector<16x1xf32>
    %94 = arith.subf %85, %92 : vector<16x1xf32>
    %95 = arith.mulf %94, %93 : vector<16x1xf32>
    %96 = vector.shape_cast %95 : vector<16x1xf32> to vector<1x16x1xf32>
    %cst_23 = arith.constant dense<0.000000e+00> : vector<1xf32>
    %97 = vector.multi_reduction <add>, %96, %cst_23 [1, 2] : vector<1x16x1xf32> to vector<1xf32>
    %98 = vector.shape_cast %97 : vector<1xf32> to vector<1x1x1xf32>
    %99 = vector.extract %98[0, 0, 0] : f32 from vector<1x1x1xf32>
    %100 = vector.shape_cast %93 : vector<16x1xf32> to vector<1x16x1xf32>
    %cst_24 = arith.constant dense<0.000000e+00> : vector<1xf32>
    %101 = vector.multi_reduction <add>, %100, %cst_24 [1, 2] : vector<1x16x1xf32> to vector<1xf32>
    %102 = vector.shape_cast %101 : vector<1xf32> to vector<1x1x1xf32>
    %103 = vector.extract %102[0, 0, 0] : f32 from vector<1x1x1xf32>
    %c0_i32 = arith.constant 0 : i32
    %104 = vector.broadcast %c0_i32 : i32 to vector<8x128xi32>
    %105 = arith.cmpi eq, %73, %104 : vector<8x128xi32>
    %c0_i32_25 = arith.constant 0 : i32
    %106 = vector.broadcast %c0_i32_25 : i32 to vector<8x128xi32>
    %107 = arith.cmpi eq, %74, %106 : vector<8x128xi32>
    %108 = arith.andi %105, %107 : vector<8x128xi1>
    %109 = vector.broadcast %99 : f32 to vector<8x128xf32>
    %110 = arith.select %108, %109, %75 : vector<8x128xi1>, vector<8x128xf32>
    %c1_i32 = arith.constant 1 : i32
    %111 = vector.broadcast %c1_i32 : i32 to vector<8x128xi32>
    %112 = arith.cmpi eq, %73, %111 : vector<8x128xi32>
    %c0_i32_26 = arith.constant 0 : i32
    %113 = vector.broadcast %c0_i32_26 : i32 to vector<8x128xi32>
    %114 = arith.cmpi eq, %74, %113 : vector<8x128xi32>
    %115 = arith.andi %112, %114 : vector<8x128xi1>
    %116 = vector.broadcast %103 : f32 to vector<8x128xf32>
    %117 = arith.select %115, %116, %110 : vector<8x128xi1>, vector<8x128xf32>
    %118 = vector.extract_strided_slice %69 {offsets = [0, 128], sizes = [16, 128], strides = [1, 1]} : vector<16x1152xf32> to vector<16x128xf32>
    %cst_27 = arith.constant dense<0xFF800000> : vector<16xf32>
    %119 = vector.multi_reduction <maximumf>, %118, %cst_27 [1] : vector<16x128xf32> to vector<16xf32>
    %120 = vector.shape_cast %119 : vector<16xf32> to vector<16x1xf32>
    %121 = vector.broadcast %120 : vector<16x1xf32> to vector<16x128xf32>
    %122 = arith.subf %118, %121 : vector<16x128xf32>
    %123 = math.exp %122 : vector<16x128xf32>
    %cst_28 = arith.constant dense<0.000000e+00> : vector<16xf32>
    %124 = vector.multi_reduction <add>, %123, %cst_28 [1] : vector<16x128xf32> to vector<16xf32>
    %125 = vector.shape_cast %124 : vector<16xf32> to vector<16x1xf32>
    %126 = math.log %125 : vector<16x1xf32>
    %127 = arith.addf %120, %126 : vector<16x1xf32>
    %128 = vector.extract_strided_slice %70 {offsets = [0, 1], sizes = [16, 1], strides = [1, 1]} : vector<16x9xi32> to vector<16x1xi32>
    %129 = vector.broadcast %128 : vector<16x1xi32> to vector<16x128xi32>
    %130 = arith.cmpi eq, %72, %129 : vector<16x128xi32>
    %cst_29 = arith.constant 0.000000e+00 : f32
    %131 = vector.broadcast %cst_29 : f32 to vector<16x128xf32>
    %132 = arith.select %130, %118, %131 : vector<16x128xi1>, vector<16x128xf32>
    %cst_30 = arith.constant dense<0.000000e+00> : vector<16xf32>
    %133 = vector.multi_reduction <add>, %132, %cst_30 [1] : vector<16x128xf32> to vector<16xf32>
    %134 = vector.shape_cast %133 : vector<16xf32> to vector<16x1xf32>
    %135 = vector.extract_strided_slice %71 {offsets = [0, 1], sizes = [16, 1], strides = [1, 1]} : vector<16x9xf32> to vector<16x1xf32>
    %136 = arith.subf %127, %134 : vector<16x1xf32>
    %137 = arith.mulf %136, %135 : vector<16x1xf32>
    %138 = vector.shape_cast %137 : vector<16x1xf32> to vector<1x16x1xf32>
    %cst_31 = arith.constant dense<0.000000e+00> : vector<1xf32>
    %139 = vector.multi_reduction <add>, %138, %cst_31 [1, 2] : vector<1x16x1xf32> to vector<1xf32>
    %140 = vector.shape_cast %139 : vector<1xf32> to vector<1x1x1xf32>
    %141 = vector.extract %140[0, 0, 0] : f32 from vector<1x1x1xf32>
    %142 = vector.shape_cast %135 : vector<16x1xf32> to vector<1x16x1xf32>
    %cst_32 = arith.constant dense<0.000000e+00> : vector<1xf32>
    %143 = vector.multi_reduction <add>, %142, %cst_32 [1, 2] : vector<1x16x1xf32> to vector<1xf32>
    %144 = vector.shape_cast %143 : vector<1xf32> to vector<1x1x1xf32>
    %145 = vector.extract %144[0, 0, 0] : f32 from vector<1x1x1xf32>
    %c0_i32_33 = arith.constant 0 : i32
    %146 = vector.broadcast %c0_i32_33 : i32 to vector<8x128xi32>
    %147 = arith.cmpi eq, %73, %146 : vector<8x128xi32>
    %c1_i32_34 = arith.constant 1 : i32
    %148 = vector.broadcast %c1_i32_34 : i32 to vector<8x128xi32>
    %149 = arith.cmpi eq, %74, %148 : vector<8x128xi32>
    %150 = arith.andi %147, %149 : vector<8x128xi1>
    %151 = vector.broadcast %141 : f32 to vector<8x128xf32>
    %152 = arith.select %150, %151, %117 : vector<8x128xi1>, vector<8x128xf32>
    %c1_i32_35 = arith.constant 1 : i32
    %153 = vector.broadcast %c1_i32_35 : i32 to vector<8x128xi32>
    %154 = arith.cmpi eq, %73, %153 : vector<8x128xi32>
    %c1_i32_36 = arith.constant 1 : i32
    %155 = vector.broadcast %c1_i32_36 : i32 to vector<8x128xi32>
    %156 = arith.cmpi eq, %74, %155 : vector<8x128xi32>
    %157 = arith.andi %154, %156 : vector<8x128xi1>
    %158 = vector.broadcast %145 : f32 to vector<8x128xf32>
    %159 = arith.select %157, %158, %152 : vector<8x128xi1>, vector<8x128xf32>
    %160 = vector.extract_strided_slice %69 {offsets = [0, 256], sizes = [16, 128], strides = [1, 1]} : vector<16x1152xf32> to vector<16x128xf32>
    %cst_37 = arith.constant dense<0xFF800000> : vector<16xf32>
    %161 = vector.multi_reduction <maximumf>, %160, %cst_37 [1] : vector<16x128xf32> to vector<16xf32>
    %162 = vector.shape_cast %161 : vector<16xf32> to vector<16x1xf32>
    %163 = vector.broadcast %162 : vector<16x1xf32> to vector<16x128xf32>
    %164 = arith.subf %160, %163 : vector<16x128xf32>
    %165 = math.exp %164 : vector<16x128xf32>
    %cst_38 = arith.constant dense<0.000000e+00> : vector<16xf32>
    %166 = vector.multi_reduction <add>, %165, %cst_38 [1] : vector<16x128xf32> to vector<16xf32>
    %167 = vector.shape_cast %166 : vector<16xf32> to vector<16x1xf32>
    %168 = math.log %167 : vector<16x1xf32>
    %169 = arith.addf %162, %168 : vector<16x1xf32>
    %170 = vector.extract_strided_slice %70 {offsets = [0, 2], sizes = [16, 1], strides = [1, 1]} : vector<16x9xi32> to vector<16x1xi32>
    %171 = vector.broadcast %170 : vector<16x1xi32> to vector<16x128xi32>
    %172 = arith.cmpi eq, %72, %171 : vector<16x128xi32>
    %cst_39 = arith.constant 0.000000e+00 : f32
    %173 = vector.broadcast %cst_39 : f32 to vector<16x128xf32>
    %174 = arith.select %172, %160, %173 : vector<16x128xi1>, vector<16x128xf32>
    %cst_40 = arith.constant dense<0.000000e+00> : vector<16xf32>
    %175 = vector.multi_reduction <add>, %174, %cst_40 [1] : vector<16x128xf32> to vector<16xf32>
    %176 = vector.shape_cast %175 : vector<16xf32> to vector<16x1xf32>
    %177 = vector.extract_strided_slice %71 {offsets = [0, 2], sizes = [16, 1], strides = [1, 1]} : vector<16x9xf32> to vector<16x1xf32>
    %178 = arith.subf %169, %176 : vector<16x1xf32>
    %179 = arith.mulf %178, %177 : vector<16x1xf32>
    %180 = vector.shape_cast %179 : vector<16x1xf32> to vector<1x16x1xf32>
    %cst_41 = arith.constant dense<0.000000e+00> : vector<1xf32>
    %181 = vector.multi_reduction <add>, %180, %cst_41 [1, 2] : vector<1x16x1xf32> to vector<1xf32>
    %182 = vector.shape_cast %181 : vector<1xf32> to vector<1x1x1xf32>
    %183 = vector.extract %182[0, 0, 0] : f32 from vector<1x1x1xf32>
    %184 = vector.shape_cast %177 : vector<16x1xf32> to vector<1x16x1xf32>
    %cst_42 = arith.constant dense<0.000000e+00> : vector<1xf32>
    %185 = vector.multi_reduction <add>, %184, %cst_42 [1, 2] : vector<1x16x1xf32> to vector<1xf32>
    %186 = vector.shape_cast %185 : vector<1xf32> to vector<1x1x1xf32>
    %187 = vector.extract %186[0, 0, 0] : f32 from vector<1x1x1xf32>
    %c0_i32_43 = arith.constant 0 : i32
    %188 = vector.broadcast %c0_i32_43 : i32 to vector<8x128xi32>
    %189 = arith.cmpi eq, %73, %188 : vector<8x128xi32>
    %c2_i32 = arith.constant 2 : i32
    %190 = vector.broadcast %c2_i32 : i32 to vector<8x128xi32>
    %191 = arith.cmpi eq, %74, %190 : vector<8x128xi32>
    %192 = arith.andi %189, %191 : vector<8x128xi1>
    %193 = vector.broadcast %183 : f32 to vector<8x128xf32>
    %194 = arith.select %192, %193, %159 : vector<8x128xi1>, vector<8x128xf32>
    %c1_i32_44 = arith.constant 1 : i32
    %195 = vector.broadcast %c1_i32_44 : i32 to vector<8x128xi32>
    %196 = arith.cmpi eq, %73, %195 : vector<8x128xi32>
    %c2_i32_45 = arith.constant 2 : i32
    %197 = vector.broadcast %c2_i32_45 : i32 to vector<8x128xi32>
    %198 = arith.cmpi eq, %74, %197 : vector<8x128xi32>
    %199 = arith.andi %196, %198 : vector<8x128xi1>
    %200 = vector.broadcast %187 : f32 to vector<8x128xf32>
    %201 = arith.select %199, %200, %194 : vector<8x128xi1>, vector<8x128xf32>
    %202 = vector.extract_strided_slice %69 {offsets = [0, 384], sizes = [16, 128], strides = [1, 1]} : vector<16x1152xf32> to vector<16x128xf32>
    %cst_46 = arith.constant dense<0xFF800000> : vector<16xf32>
    %203 = vector.multi_reduction <maximumf>, %202, %cst_46 [1] : vector<16x128xf32> to vector<16xf32>
    %204 = vector.shape_cast %203 : vector<16xf32> to vector<16x1xf32>
    %205 = vector.broadcast %204 : vector<16x1xf32> to vector<16x128xf32>
    %206 = arith.subf %202, %205 : vector<16x128xf32>
    %207 = math.exp %206 : vector<16x128xf32>
    %cst_47 = arith.constant dense<0.000000e+00> : vector<16xf32>
    %208 = vector.multi_reduction <add>, %207, %cst_47 [1] : vector<16x128xf32> to vector<16xf32>
    %209 = vector.shape_cast %208 : vector<16xf32> to vector<16x1xf32>
    %210 = math.log %209 : vector<16x1xf32>
    %211 = arith.addf %204, %210 : vector<16x1xf32>
    %212 = vector.extract_strided_slice %70 {offsets = [0, 3], sizes = [16, 1], strides = [1, 1]} : vector<16x9xi32> to vector<16x1xi32>
    %213 = vector.broadcast %212 : vector<16x1xi32> to vector<16x128xi32>
    %214 = arith.cmpi eq, %72, %213 : vector<16x128xi32>
    %cst_48 = arith.constant 0.000000e+00 : f32
    %215 = vector.broadcast %cst_48 : f32 to vector<16x128xf32>
    %216 = arith.select %214, %202, %215 : vector<16x128xi1>, vector<16x128xf32>
    %cst_49 = arith.constant dense<0.000000e+00> : vector<16xf32>
    %217 = vector.multi_reduction <add>, %216, %cst_49 [1] : vector<16x128xf32> to vector<16xf32>
    %218 = vector.shape_cast %217 : vector<16xf32> to vector<16x1xf32>
    %219 = vector.extract_strided_slice %71 {offsets = [0, 3], sizes = [16, 1], strides = [1, 1]} : vector<16x9xf32> to vector<16x1xf32>
    %220 = arith.subf %211, %218 : vector<16x1xf32>
    %221 = arith.mulf %220, %219 : vector<16x1xf32>
    %222 = vector.shape_cast %221 : vector<16x1xf32> to vector<1x16x1xf32>
    %cst_50 = arith.constant dense<0.000000e+00> : vector<1xf32>
    %223 = vector.multi_reduction <add>, %222, %cst_50 [1, 2] : vector<1x16x1xf32> to vector<1xf32>
    %224 = vector.shape_cast %223 : vector<1xf32> to vector<1x1x1xf32>
    %225 = vector.extract %224[0, 0, 0] : f32 from vector<1x1x1xf32>
    %226 = vector.shape_cast %219 : vector<16x1xf32> to vector<1x16x1xf32>
    %cst_51 = arith.constant dense<0.000000e+00> : vector<1xf32>
    %227 = vector.multi_reduction <add>, %226, %cst_51 [1, 2] : vector<1x16x1xf32> to vector<1xf32>
    %228 = vector.shape_cast %227 : vector<1xf32> to vector<1x1x1xf32>
    %229 = vector.extract %228[0, 0, 0] : f32 from vector<1x1x1xf32>
    %c0_i32_52 = arith.constant 0 : i32
    %230 = vector.broadcast %c0_i32_52 : i32 to vector<8x128xi32>
    %231 = arith.cmpi eq, %73, %230 : vector<8x128xi32>
    %c3_i32 = arith.constant 3 : i32
    %232 = vector.broadcast %c3_i32 : i32 to vector<8x128xi32>
    %233 = arith.cmpi eq, %74, %232 : vector<8x128xi32>
    %234 = arith.andi %231, %233 : vector<8x128xi1>
    %235 = vector.broadcast %225 : f32 to vector<8x128xf32>
    %236 = arith.select %234, %235, %201 : vector<8x128xi1>, vector<8x128xf32>
    %c1_i32_53 = arith.constant 1 : i32
    %237 = vector.broadcast %c1_i32_53 : i32 to vector<8x128xi32>
    %238 = arith.cmpi eq, %73, %237 : vector<8x128xi32>
    %c3_i32_54 = arith.constant 3 : i32
    %239 = vector.broadcast %c3_i32_54 : i32 to vector<8x128xi32>
    %240 = arith.cmpi eq, %74, %239 : vector<8x128xi32>
    %241 = arith.andi %238, %240 : vector<8x128xi1>
    %242 = vector.broadcast %229 : f32 to vector<8x128xf32>
    %243 = arith.select %241, %242, %236 : vector<8x128xi1>, vector<8x128xf32>
    %244 = vector.extract_strided_slice %69 {offsets = [0, 512], sizes = [16, 128], strides = [1, 1]} : vector<16x1152xf32> to vector<16x128xf32>
    %cst_55 = arith.constant dense<0xFF800000> : vector<16xf32>
    %245 = vector.multi_reduction <maximumf>, %244, %cst_55 [1] : vector<16x128xf32> to vector<16xf32>
    %246 = vector.shape_cast %245 : vector<16xf32> to vector<16x1xf32>
    %247 = vector.broadcast %246 : vector<16x1xf32> to vector<16x128xf32>
    %248 = arith.subf %244, %247 : vector<16x128xf32>
    %249 = math.exp %248 : vector<16x128xf32>
    %cst_56 = arith.constant dense<0.000000e+00> : vector<16xf32>
    %250 = vector.multi_reduction <add>, %249, %cst_56 [1] : vector<16x128xf32> to vector<16xf32>
    %251 = vector.shape_cast %250 : vector<16xf32> to vector<16x1xf32>
    %252 = math.log %251 : vector<16x1xf32>
    %253 = arith.addf %246, %252 : vector<16x1xf32>
    %254 = vector.extract_strided_slice %70 {offsets = [0, 4], sizes = [16, 1], strides = [1, 1]} : vector<16x9xi32> to vector<16x1xi32>
    %255 = vector.broadcast %254 : vector<16x1xi32> to vector<16x128xi32>
    %256 = arith.cmpi eq, %72, %255 : vector<16x128xi32>
    %cst_57 = arith.constant 0.000000e+00 : f32
    %257 = vector.broadcast %cst_57 : f32 to vector<16x128xf32>
    %258 = arith.select %256, %244, %257 : vector<16x128xi1>, vector<16x128xf32>
    %cst_58 = arith.constant dense<0.000000e+00> : vector<16xf32>
    %259 = vector.multi_reduction <add>, %258, %cst_58 [1] : vector<16x128xf32> to vector<16xf32>
    %260 = vector.shape_cast %259 : vector<16xf32> to vector<16x1xf32>
    %261 = vector.extract_strided_slice %71 {offsets = [0, 4], sizes = [16, 1], strides = [1, 1]} : vector<16x9xf32> to vector<16x1xf32>
    %262 = arith.subf %253, %260 : vector<16x1xf32>
    %263 = arith.mulf %262, %261 : vector<16x1xf32>
    %264 = vector.shape_cast %263 : vector<16x1xf32> to vector<1x16x1xf32>
    %cst_59 = arith.constant dense<0.000000e+00> : vector<1xf32>
    %265 = vector.multi_reduction <add>, %264, %cst_59 [1, 2] : vector<1x16x1xf32> to vector<1xf32>
    %266 = vector.shape_cast %265 : vector<1xf32> to vector<1x1x1xf32>
    %267 = vector.extract %266[0, 0, 0] : f32 from vector<1x1x1xf32>
    %268 = vector.shape_cast %261 : vector<16x1xf32> to vector<1x16x1xf32>
    %cst_60 = arith.constant dense<0.000000e+00> : vector<1xf32>
    %269 = vector.multi_reduction <add>, %268, %cst_60 [1, 2] : vector<1x16x1xf32> to vector<1xf32>
    %270 = vector.shape_cast %269 : vector<1xf32> to vector<1x1x1xf32>
    %271 = vector.extract %270[0, 0, 0] : f32 from vector<1x1x1xf32>
    %c0_i32_61 = arith.constant 0 : i32
    %272 = vector.broadcast %c0_i32_61 : i32 to vector<8x128xi32>
    %273 = arith.cmpi eq, %73, %272 : vector<8x128xi32>
    %c4_i32 = arith.constant 4 : i32
    %274 = vector.broadcast %c4_i32 : i32 to vector<8x128xi32>
    %275 = arith.cmpi eq, %74, %274 : vector<8x128xi32>
    %276 = arith.andi %273, %275 : vector<8x128xi1>
    %277 = vector.broadcast %267 : f32 to vector<8x128xf32>
    %278 = arith.select %276, %277, %243 : vector<8x128xi1>, vector<8x128xf32>
    %c1_i32_62 = arith.constant 1 : i32
    %279 = vector.broadcast %c1_i32_62 : i32 to vector<8x128xi32>
    %280 = arith.cmpi eq, %73, %279 : vector<8x128xi32>
    %c4_i32_63 = arith.constant 4 : i32
    %281 = vector.broadcast %c4_i32_63 : i32 to vector<8x128xi32>
    %282 = arith.cmpi eq, %74, %281 : vector<8x128xi32>
    %283 = arith.andi %280, %282 : vector<8x128xi1>
    %284 = vector.broadcast %271 : f32 to vector<8x128xf32>
    %285 = arith.select %283, %284, %278 : vector<8x128xi1>, vector<8x128xf32>
    %286 = vector.extract_strided_slice %69 {offsets = [0, 640], sizes = [16, 128], strides = [1, 1]} : vector<16x1152xf32> to vector<16x128xf32>
    %cst_64 = arith.constant dense<0xFF800000> : vector<16xf32>
    %287 = vector.multi_reduction <maximumf>, %286, %cst_64 [1] : vector<16x128xf32> to vector<16xf32>
    %288 = vector.shape_cast %287 : vector<16xf32> to vector<16x1xf32>
    %289 = vector.broadcast %288 : vector<16x1xf32> to vector<16x128xf32>
    %290 = arith.subf %286, %289 : vector<16x128xf32>
    %291 = math.exp %290 : vector<16x128xf32>
    %cst_65 = arith.constant dense<0.000000e+00> : vector<16xf32>
    %292 = vector.multi_reduction <add>, %291, %cst_65 [1] : vector<16x128xf32> to vector<16xf32>
    %293 = vector.shape_cast %292 : vector<16xf32> to vector<16x1xf32>
    %294 = math.log %293 : vector<16x1xf32>
    %295 = arith.addf %288, %294 : vector<16x1xf32>
    %296 = vector.extract_strided_slice %70 {offsets = [0, 5], sizes = [16, 1], strides = [1, 1]} : vector<16x9xi32> to vector<16x1xi32>
    %297 = vector.broadcast %296 : vector<16x1xi32> to vector<16x128xi32>
    %298 = arith.cmpi eq, %72, %297 : vector<16x128xi32>
    %cst_66 = arith.constant 0.000000e+00 : f32
    %299 = vector.broadcast %cst_66 : f32 to vector<16x128xf32>
    %300 = arith.select %298, %286, %299 : vector<16x128xi1>, vector<16x128xf32>
    %cst_67 = arith.constant dense<0.000000e+00> : vector<16xf32>
    %301 = vector.multi_reduction <add>, %300, %cst_67 [1] : vector<16x128xf32> to vector<16xf32>
    %302 = vector.shape_cast %301 : vector<16xf32> to vector<16x1xf32>
    %303 = vector.extract_strided_slice %71 {offsets = [0, 5], sizes = [16, 1], strides = [1, 1]} : vector<16x9xf32> to vector<16x1xf32>
    %304 = arith.subf %295, %302 : vector<16x1xf32>
    %305 = arith.mulf %304, %303 : vector<16x1xf32>
    %306 = vector.shape_cast %305 : vector<16x1xf32> to vector<1x16x1xf32>
    %cst_68 = arith.constant dense<0.000000e+00> : vector<1xf32>
    %307 = vector.multi_reduction <add>, %306, %cst_68 [1, 2] : vector<1x16x1xf32> to vector<1xf32>
    %308 = vector.shape_cast %307 : vector<1xf32> to vector<1x1x1xf32>
    %309 = vector.extract %308[0, 0, 0] : f32 from vector<1x1x1xf32>
    %310 = vector.shape_cast %303 : vector<16x1xf32> to vector<1x16x1xf32>
    %cst_69 = arith.constant dense<0.000000e+00> : vector<1xf32>
    %311 = vector.multi_reduction <add>, %310, %cst_69 [1, 2] : vector<1x16x1xf32> to vector<1xf32>
    %312 = vector.shape_cast %311 : vector<1xf32> to vector<1x1x1xf32>
    %313 = vector.extract %312[0, 0, 0] : f32 from vector<1x1x1xf32>
    %c0_i32_70 = arith.constant 0 : i32
    %314 = vector.broadcast %c0_i32_70 : i32 to vector<8x128xi32>
    %315 = arith.cmpi eq, %73, %314 : vector<8x128xi32>
    %c5_i32 = arith.constant 5 : i32
    %316 = vector.broadcast %c5_i32 : i32 to vector<8x128xi32>
    %317 = arith.cmpi eq, %74, %316 : vector<8x128xi32>
    %318 = arith.andi %315, %317 : vector<8x128xi1>
    %319 = vector.broadcast %309 : f32 to vector<8x128xf32>
    %320 = arith.select %318, %319, %285 : vector<8x128xi1>, vector<8x128xf32>
    %c1_i32_71 = arith.constant 1 : i32
    %321 = vector.broadcast %c1_i32_71 : i32 to vector<8x128xi32>
    %322 = arith.cmpi eq, %73, %321 : vector<8x128xi32>
    %c5_i32_72 = arith.constant 5 : i32
    %323 = vector.broadcast %c5_i32_72 : i32 to vector<8x128xi32>
    %324 = arith.cmpi eq, %74, %323 : vector<8x128xi32>
    %325 = arith.andi %322, %324 : vector<8x128xi1>
    %326 = vector.broadcast %313 : f32 to vector<8x128xf32>
    %327 = arith.select %325, %326, %320 : vector<8x128xi1>, vector<8x128xf32>
    %328 = vector.extract_strided_slice %69 {offsets = [0, 768], sizes = [16, 128], strides = [1, 1]} : vector<16x1152xf32> to vector<16x128xf32>
    %cst_73 = arith.constant dense<0xFF800000> : vector<16xf32>
    %329 = vector.multi_reduction <maximumf>, %328, %cst_73 [1] : vector<16x128xf32> to vector<16xf32>
    %330 = vector.shape_cast %329 : vector<16xf32> to vector<16x1xf32>
    %331 = vector.broadcast %330 : vector<16x1xf32> to vector<16x128xf32>
    %332 = arith.subf %328, %331 : vector<16x128xf32>
    %333 = math.exp %332 : vector<16x128xf32>
    %cst_74 = arith.constant dense<0.000000e+00> : vector<16xf32>
    %334 = vector.multi_reduction <add>, %333, %cst_74 [1] : vector<16x128xf32> to vector<16xf32>
    %335 = vector.shape_cast %334 : vector<16xf32> to vector<16x1xf32>
    %336 = math.log %335 : vector<16x1xf32>
    %337 = arith.addf %330, %336 : vector<16x1xf32>
    %338 = vector.extract_strided_slice %70 {offsets = [0, 6], sizes = [16, 1], strides = [1, 1]} : vector<16x9xi32> to vector<16x1xi32>
    %339 = vector.broadcast %338 : vector<16x1xi32> to vector<16x128xi32>
    %340 = arith.cmpi eq, %72, %339 : vector<16x128xi32>
    %cst_75 = arith.constant 0.000000e+00 : f32
    %341 = vector.broadcast %cst_75 : f32 to vector<16x128xf32>
    %342 = arith.select %340, %328, %341 : vector<16x128xi1>, vector<16x128xf32>
    %cst_76 = arith.constant dense<0.000000e+00> : vector<16xf32>
    %343 = vector.multi_reduction <add>, %342, %cst_76 [1] : vector<16x128xf32> to vector<16xf32>
    %344 = vector.shape_cast %343 : vector<16xf32> to vector<16x1xf32>
    %345 = vector.extract_strided_slice %71 {offsets = [0, 6], sizes = [16, 1], strides = [1, 1]} : vector<16x9xf32> to vector<16x1xf32>
    %346 = arith.subf %337, %344 : vector<16x1xf32>
    %347 = arith.mulf %346, %345 : vector<16x1xf32>
    %348 = vector.shape_cast %347 : vector<16x1xf32> to vector<1x16x1xf32>
    %cst_77 = arith.constant dense<0.000000e+00> : vector<1xf32>
    %349 = vector.multi_reduction <add>, %348, %cst_77 [1, 2] : vector<1x16x1xf32> to vector<1xf32>
    %350 = vector.shape_cast %349 : vector<1xf32> to vector<1x1x1xf32>
    %351 = vector.extract %350[0, 0, 0] : f32 from vector<1x1x1xf32>
    %352 = vector.shape_cast %345 : vector<16x1xf32> to vector<1x16x1xf32>
    %cst_78 = arith.constant dense<0.000000e+00> : vector<1xf32>
    %353 = vector.multi_reduction <add>, %352, %cst_78 [1, 2] : vector<1x16x1xf32> to vector<1xf32>
    %354 = vector.shape_cast %353 : vector<1xf32> to vector<1x1x1xf32>
    %355 = vector.extract %354[0, 0, 0] : f32 from vector<1x1x1xf32>
    %c0_i32_79 = arith.constant 0 : i32
    %356 = vector.broadcast %c0_i32_79 : i32 to vector<8x128xi32>
    %357 = arith.cmpi eq, %73, %356 : vector<8x128xi32>
    %c6_i32 = arith.constant 6 : i32
    %358 = vector.broadcast %c6_i32 : i32 to vector<8x128xi32>
    %359 = arith.cmpi eq, %74, %358 : vector<8x128xi32>
    %360 = arith.andi %357, %359 : vector<8x128xi1>
    %361 = vector.broadcast %351 : f32 to vector<8x128xf32>
    %362 = arith.select %360, %361, %327 : vector<8x128xi1>, vector<8x128xf32>
    %c1_i32_80 = arith.constant 1 : i32
    %363 = vector.broadcast %c1_i32_80 : i32 to vector<8x128xi32>
    %364 = arith.cmpi eq, %73, %363 : vector<8x128xi32>
    %c6_i32_81 = arith.constant 6 : i32
    %365 = vector.broadcast %c6_i32_81 : i32 to vector<8x128xi32>
    %366 = arith.cmpi eq, %74, %365 : vector<8x128xi32>
    %367 = arith.andi %364, %366 : vector<8x128xi1>
    %368 = vector.broadcast %355 : f32 to vector<8x128xf32>
    %369 = arith.select %367, %368, %362 : vector<8x128xi1>, vector<8x128xf32>
    %370 = vector.extract_strided_slice %69 {offsets = [0, 896], sizes = [16, 128], strides = [1, 1]} : vector<16x1152xf32> to vector<16x128xf32>
    %cst_82 = arith.constant dense<0xFF800000> : vector<16xf32>
    %371 = vector.multi_reduction <maximumf>, %370, %cst_82 [1] : vector<16x128xf32> to vector<16xf32>
    %372 = vector.shape_cast %371 : vector<16xf32> to vector<16x1xf32>
    %373 = vector.broadcast %372 : vector<16x1xf32> to vector<16x128xf32>
    %374 = arith.subf %370, %373 : vector<16x128xf32>
    %375 = math.exp %374 : vector<16x128xf32>
    %cst_83 = arith.constant dense<0.000000e+00> : vector<16xf32>
    %376 = vector.multi_reduction <add>, %375, %cst_83 [1] : vector<16x128xf32> to vector<16xf32>
    %377 = vector.shape_cast %376 : vector<16xf32> to vector<16x1xf32>
    %378 = math.log %377 : vector<16x1xf32>
    %379 = arith.addf %372, %378 : vector<16x1xf32>
    %380 = vector.extract_strided_slice %70 {offsets = [0, 7], sizes = [16, 1], strides = [1, 1]} : vector<16x9xi32> to vector<16x1xi32>
    %381 = vector.broadcast %380 : vector<16x1xi32> to vector<16x128xi32>
    %382 = arith.cmpi eq, %72, %381 : vector<16x128xi32>
    %cst_84 = arith.constant 0.000000e+00 : f32
    %383 = vector.broadcast %cst_84 : f32 to vector<16x128xf32>
    %384 = arith.select %382, %370, %383 : vector<16x128xi1>, vector<16x128xf32>
    %cst_85 = arith.constant dense<0.000000e+00> : vector<16xf32>
    %385 = vector.multi_reduction <add>, %384, %cst_85 [1] : vector<16x128xf32> to vector<16xf32>
    %386 = vector.shape_cast %385 : vector<16xf32> to vector<16x1xf32>
    %387 = vector.extract_strided_slice %71 {offsets = [0, 7], sizes = [16, 1], strides = [1, 1]} : vector<16x9xf32> to vector<16x1xf32>
    %388 = arith.subf %379, %386 : vector<16x1xf32>
    %389 = arith.mulf %388, %387 : vector<16x1xf32>
    %390 = vector.shape_cast %389 : vector<16x1xf32> to vector<1x16x1xf32>
    %cst_86 = arith.constant dense<0.000000e+00> : vector<1xf32>
    %391 = vector.multi_reduction <add>, %390, %cst_86 [1, 2] : vector<1x16x1xf32> to vector<1xf32>
    %392 = vector.shape_cast %391 : vector<1xf32> to vector<1x1x1xf32>
    %393 = vector.extract %392[0, 0, 0] : f32 from vector<1x1x1xf32>
    %394 = vector.shape_cast %387 : vector<16x1xf32> to vector<1x16x1xf32>
    %cst_87 = arith.constant dense<0.000000e+00> : vector<1xf32>
    %395 = vector.multi_reduction <add>, %394, %cst_87 [1, 2] : vector<1x16x1xf32> to vector<1xf32>
    %396 = vector.shape_cast %395 : vector<1xf32> to vector<1x1x1xf32>
    %397 = vector.extract %396[0, 0, 0] : f32 from vector<1x1x1xf32>
    %c0_i32_88 = arith.constant 0 : i32
    %398 = vector.broadcast %c0_i32_88 : i32 to vector<8x128xi32>
    %399 = arith.cmpi eq, %73, %398 : vector<8x128xi32>
    %c7_i32 = arith.constant 7 : i32
    %400 = vector.broadcast %c7_i32 : i32 to vector<8x128xi32>
    %401 = arith.cmpi eq, %74, %400 : vector<8x128xi32>
    %402 = arith.andi %399, %401 : vector<8x128xi1>
    %403 = vector.broadcast %393 : f32 to vector<8x128xf32>
    %404 = arith.select %402, %403, %369 : vector<8x128xi1>, vector<8x128xf32>
    %c1_i32_89 = arith.constant 1 : i32
    %405 = vector.broadcast %c1_i32_89 : i32 to vector<8x128xi32>
    %406 = arith.cmpi eq, %73, %405 : vector<8x128xi32>
    %c7_i32_90 = arith.constant 7 : i32
    %407 = vector.broadcast %c7_i32_90 : i32 to vector<8x128xi32>
    %408 = arith.cmpi eq, %74, %407 : vector<8x128xi32>
    %409 = arith.andi %406, %408 : vector<8x128xi1>
    %410 = vector.broadcast %397 : f32 to vector<8x128xf32>
    %411 = arith.select %409, %410, %404 : vector<8x128xi1>, vector<8x128xf32>
    %412 = vector.extract_strided_slice %69 {offsets = [0, 1024], sizes = [16, 128], strides = [1, 1]} : vector<16x1152xf32> to vector<16x128xf32>
    %cst_91 = arith.constant dense<0xFF800000> : vector<16xf32>
    %413 = vector.multi_reduction <maximumf>, %412, %cst_91 [1] : vector<16x128xf32> to vector<16xf32>
    %414 = vector.shape_cast %413 : vector<16xf32> to vector<16x1xf32>
    %415 = vector.broadcast %414 : vector<16x1xf32> to vector<16x128xf32>
    %416 = arith.subf %412, %415 : vector<16x128xf32>
    %417 = math.exp %416 : vector<16x128xf32>
    %cst_92 = arith.constant dense<0.000000e+00> : vector<16xf32>
    %418 = vector.multi_reduction <add>, %417, %cst_92 [1] : vector<16x128xf32> to vector<16xf32>
    %419 = vector.shape_cast %418 : vector<16xf32> to vector<16x1xf32>
    %420 = math.log %419 : vector<16x1xf32>
    %421 = arith.addf %414, %420 : vector<16x1xf32>
    %422 = vector.extract_strided_slice %70 {offsets = [0, 8], sizes = [16, 1], strides = [1, 1]} : vector<16x9xi32> to vector<16x1xi32>
    %423 = vector.broadcast %422 : vector<16x1xi32> to vector<16x128xi32>
    %424 = arith.cmpi eq, %72, %423 : vector<16x128xi32>
    %cst_93 = arith.constant 0.000000e+00 : f32
    %425 = vector.broadcast %cst_93 : f32 to vector<16x128xf32>
    %426 = arith.select %424, %412, %425 : vector<16x128xi1>, vector<16x128xf32>
    %cst_94 = arith.constant dense<0.000000e+00> : vector<16xf32>
    %427 = vector.multi_reduction <add>, %426, %cst_94 [1] : vector<16x128xf32> to vector<16xf32>
    %428 = vector.shape_cast %427 : vector<16xf32> to vector<16x1xf32>
    %429 = vector.extract_strided_slice %71 {offsets = [0, 8], sizes = [16, 1], strides = [1, 1]} : vector<16x9xf32> to vector<16x1xf32>
    %430 = arith.subf %421, %428 : vector<16x1xf32>
    %431 = arith.mulf %430, %429 : vector<16x1xf32>
    %432 = vector.shape_cast %431 : vector<16x1xf32> to vector<1x16x1xf32>
    %cst_95 = arith.constant dense<0.000000e+00> : vector<1xf32>
    %433 = vector.multi_reduction <add>, %432, %cst_95 [1, 2] : vector<1x16x1xf32> to vector<1xf32>
    %434 = vector.shape_cast %433 : vector<1xf32> to vector<1x1x1xf32>
    %435 = vector.extract %434[0, 0, 0] : f32 from vector<1x1x1xf32>
    %436 = vector.shape_cast %429 : vector<16x1xf32> to vector<1x16x1xf32>
    %cst_96 = arith.constant dense<0.000000e+00> : vector<1xf32>
    %437 = vector.multi_reduction <add>, %436, %cst_96 [1, 2] : vector<1x16x1xf32> to vector<1xf32>
    %438 = vector.shape_cast %437 : vector<1xf32> to vector<1x1x1xf32>
    %439 = vector.extract %438[0, 0, 0] : f32 from vector<1x1x1xf32>
    %c0_i32_97 = arith.constant 0 : i32
    %440 = vector.broadcast %c0_i32_97 : i32 to vector<8x128xi32>
    %441 = arith.cmpi eq, %73, %440 : vector<8x128xi32>
    %c8_i32 = arith.constant 8 : i32
    %442 = vector.broadcast %c8_i32 : i32 to vector<8x128xi32>
    %443 = arith.cmpi eq, %74, %442 : vector<8x128xi32>
    %444 = arith.andi %441, %443 : vector<8x128xi1>
    %445 = vector.broadcast %435 : f32 to vector<8x128xf32>
    %446 = arith.select %444, %445, %411 : vector<8x128xi1>, vector<8x128xf32>
    %c1_i32_98 = arith.constant 1 : i32
    %447 = vector.broadcast %c1_i32_98 : i32 to vector<8x128xi32>
    %448 = arith.cmpi eq, %73, %447 : vector<8x128xi32>
    %c8_i32_99 = arith.constant 8 : i32
    %449 = vector.broadcast %c8_i32_99 : i32 to vector<8x128xi32>
    %450 = arith.cmpi eq, %74, %449 : vector<8x128xi32>
    %451 = arith.andi %448, %450 : vector<8x128xi1>
    %452 = vector.broadcast %439 : f32 to vector<8x128xf32>
    %453 = arith.select %451, %452, %446 : vector<8x128xi1>, vector<8x128xf32>
    %c0_100 = arith.constant 0 : index
    %c0_101 = arith.constant 0 : index
    %454 = vector.load %arg9[%c0_100, %c0_101] : memref<8x128xf32, #tpu.memory_space<vmem>>, vector<8x128xf32>
    tpu.vector_store %arg9[%c0_100, %c0_101], %453 {strides = array<i32>} : memref<8x128xf32, #tpu.memory_space<vmem>>, vector<8x128xf32>,
    return
  }
  func.func @transform_0(%arg0: i32) -> (i32, i32) {
    %c0_i32 = arith.constant 0 : i32
    %c0_i32_0 = arith.constant 0 : i32
    %c0_i32_1 = arith.constant 0 : i32
    return %c0_i32, %c0_i32_0 : i32, i32
  }
  func.func @transform_1(%arg0: i32) -> (i32, i32) {
    %c0_i32 = arith.constant 0 : i32
    %c0_i32_0 = arith.constant 0 : i32
    %c0_i32_1 = arith.constant 0 : i32
    return %c0_i32, %c0_i32_0 : i32, i32
  }
  func.func @transform_2(%arg0: i32) -> (i32, i32) {
    %c0_i32 = arith.constant 0 : i32
    %c0_i32_0 = arith.constant 0 : i32
    %c0_i32_1 = arith.constant 0 : i32
    return %c0_i32, %c0_i32_0 : i32, i32
  }
  func.func @transform_3(%arg0: i32) -> (i32, i32) {
    %c0_i32 = arith.constant 0 : i32
    %c0_i32_0 = arith.constant 0 : i32
    %c0_i32_1 = arith.constant 0 : i32
    return %c0_i32, %c0_i32_0 : i32, i32
  }
  func.func @transform_4(%arg0: i32) -> (i32, i32) {
    %c0_i32 = arith.constant 0 : i32
    %c0_i32_0 = arith.constant 0 : i32
    %c0_i32_1 = arith.constant 0 : i32
    return %c0_i32, %c0_i32_0 : i32, i32
  }
  func.func @transform_5(%arg0: i32) -> (i32, i32) {
    %c0_i32 = arith.constant 0 : i32
    %c0_i32_0 = arith.constant 0 : i32
    %c0_i32_1 = arith.constant 0 : i32
    return %c0_i32, %c0_i32_0 : i32, i32
  }
  func.func @transform_6(%arg0: i32) -> (i32, i32) {
    %c0_i32 = arith.constant 0 : i32
    %c0_i32_0 = arith.constant 0 : i32
    %c0_i32_1 = arith.constant 0 : i32
    return %c0_i32, %c0_i32_0 : i32, i32
  }
  func.func @transform_7(%arg0: i32) -> (i32, i32) {
    %c0_i32 = arith.constant 0 : i32
    %c0_i32_0 = arith.constant 0 : i32
    %c0_i32_1 = arith.constant 0 : i32
    return %c0_i32, %c0_i32_0 : i32, i32
  }
  func.func @transform_8(%arg0: i32) -> (i32, i32) {
    %c0_i32 = arith.constant 0 : i32
    %c0_i32_0 = arith.constant 0 : i32
    %c0_i32_1 = arith.constant 0 : i32
    return %c0_i32, %c0_i32_0 : i32, i32
  }
}

</mosaic_0001>

<llo_original>
// kernel: tpu_custom_call.1
$region0: #{tpu_custom_call.1}
  #allocation0 [shape = 'u32[]', space=smem, size = 0x4, offset = 0x4, fixed_abs, tag = 'smem constant byte address 0x4 - core index']
  #allocation1 [shape = 'u32[144,128]{1,0:T(1,128)}', space=vmem, size = 0x12000, scoped, tag = 'internal scratch']
  %s0 = inlined_call_operand.vmem [shape: s32[16,9], index: 0, kind: input, shape index: {}]
  %s1 = inlined_call_operand.vmem [shape: s32[16,9], index: 1, kind: input, shape index: {}]
  %s2 = inlined_call_operand.vmem [shape: f32[16,9], index: 2, kind: input, shape index: {}]
  %s3 = inlined_call_operand.vmem [shape: f32[128,32], index: 3, kind: input, shape index: {}]
  %s4 = inlined_call_operand.vmem [shape: f32[32,32], index: 4, kind: input, shape index: {}]
  %s5 = inlined_call_operand.vmem [shape: f32[1,32], index: 5, kind: input, shape index: {}]
  %s6 = inlined_call_operand.hbm [shape: f32[32,1152], index: 6, kind: input, shape index: {}]
  %s7 = inlined_call_operand.vmem [shape: f32[1,1152], index: 7, kind: input, shape index: {}]
  %s8 = inlined_call_operand.hbm [shape: f32[8,128], index: 8, kind: output, shape index: {}]
  %s9 = sld [smem:[#allocation0]]
  $region46: #{tpu_custom_call.1} parent=0
    _
  %s11 = ssub.s32 1, %s9
  %s12 = scalar_select 0, %s11, %s9
  $region1: #{tpu_custom_call.1} parent=0
    #allocation2 [shape = 'u8[147456]{0}', space=vmem, size = 0x24000, scoped, tag = 'input window, operand 6, single buffered']
    #allocation3 [shape = 's32[1]{0}', space=sflag, size = 0x4, scoped, tag = 'scoped memory for tpu_custom_call.1']
    #allocation4 [shape = 's32[1]{0}', space=sflag, size = 0x4, scoped, tag = 'scoped memory for tpu_custom_call.1']
    #allocation5 [shape = 'u8[4096]{0}', space=vmem, size = 0x1000, scoped, tag = 'output window, operand 0, single buffered']
    %13 = vsyncpa [#allocation3], 0
    %14 = vsyncpa [#allocation4], 0
    // Predicated region
    $region2: #{tpu_custom_call.1} parent=1 // pred_check
      _
    $region3: #{tpu_custom_call.1} parent=1 // pred_check_branch
      %16 = sbr.rel (0) target = $region5
    $region4: #{tpu_custom_call.1} parent=1 // pred_region
      _
    $region5: #{tpu_custom_call.1} parent=1 // pred_fallthru
      _
    // Predicated region
    $region6: #{tpu_custom_call.1} parent=1 // pred_check
      _
    $region7: #{tpu_custom_call.1} parent=1 // pred_check_branch
      %18 = sbr.rel (0) target = $region9
    $region8: #{tpu_custom_call.1} parent=1 // pred_region
      _
    $region9: #{tpu_custom_call.1} parent=1 // pred_fallthru
      _
    // Predicated region
    $region10: #{tpu_custom_call.1} parent=1 // pred_check
      _
    $region11: #{tpu_custom_call.1} parent=1 // pred_check_branch
      %20 = sbr.rel (0) target = $region13
    $region12: #{tpu_custom_call.1} parent=1 // pred_region
      _
    $region13: #{tpu_custom_call.1} parent=1 // pred_fallthru
      _
    // Predicated region
    $region14: #{tpu_custom_call.1} parent=1 // pred_check
      _
    $region15: #{tpu_custom_call.1} parent=1 // pred_check_branch
      %22 = sbr.rel (0) target = $region17
    $region16: #{tpu_custom_call.1} parent=1 // pred_region
      _
    $region17: #{tpu_custom_call.1} parent=1 // pred_fallthru
      _
    // Predicated region
    $region18: #{tpu_custom_call.1} parent=1 // pred_check
      _
    $region19: #{tpu_custom_call.1} parent=1 // pred_check_branch
      %24 = sbr.rel (0) target = $region21
    $region20: #{tpu_custom_call.1} parent=1 // pred_region
      _
    $region21: #{tpu_custom_call.1} parent=1 // pred_fallthru
      _
    // Predicated region
    $region22: #{tpu_custom_call.1} parent=1 // pred_check
      _
    $region23: #{tpu_custom_call.1} parent=1 // pred_check_branch
      %26 = sbr.rel (0) target = $region25
    $region24: #{tpu_custom_call.1} parent=1 // pred_region
      _
    $region25: #{tpu_custom_call.1} parent=1 // pred_fallthru
      _
    // Predicated region
    $region26: #{tpu_custom_call.1} parent=1 // pred_check
      _
    $region27: #{tpu_custom_call.1} parent=1 // pred_check_branch
      %28 = sbr.rel (0) target = $region29
    $region28: #{tpu_custom_call.1} parent=1 // pred_region
      %s30 = ssub.s32 4608, 4608
      %31 = vsyncadd [#allocation3], %s30
      %s32 = sshll.u32 [#allocation2], 4
      %s33 = int_to_ptr.vmem [resolvable:$true] %s32
      %38 = dma.hbm_to_vmem [thread:$0]  %s6, 4608, %s33, [#allocation3], 1152, 1152, 72
    $region29: #{tpu_custom_call.1} parent=1 // pred_fallthru
      _
    // Predicated region
    $region30: #{tpu_custom_call.1} parent=1 // pred_check
      _
    $region31: #{tpu_custom_call.1} parent=1 // pred_check_branch
      %40 = sbr.rel (0) target = $region33
    $region32: #{tpu_custom_call.1} parent=1 // pred_region
      _
    $region33: #{tpu_custom_call.1} parent=1 // pred_fallthru
      _
    // Predicated region
    $region34: #{tpu_custom_call.1} parent=1 // pred_check
      _
    $region35: #{tpu_custom_call.1} parent=1 // pred_check_branch
      %42 = sbr.rel (0) target = $region37
    $region36: #{tpu_custom_call.1} parent=1 // pred_region
      %43 = dma.done [#allocation3], 4608
    $region37: #{tpu_custom_call.1} parent=1 // pred_fallthru
      _
    %v44 = vld [vmem:[%s0] sm:$0xff]
    %v45 = vld [vmem:[%s0 + $0x8] sm:$0xff]
    %v46 = vlaneseq
    %v47 = vand.u32 %v46, 127
    %48 = vset.pattern.permute.xlu0 0
    %49 = vperm.xlu0 %48, %v44
    %v50 = vpop.permute.xlu0 %49
    %51 = vset.pattern.permute.xlu0 0
    %52 = vperm.xlu0 %51, %v45
    %v53 = vpop.permute.xlu0 %52
    %vm54 = vcmp.eq.s32.totalorder %v47, %v50
    %vm55 = vcmp.eq.s32.totalorder %v47, %v53
    %v56 = vsel %vm54, 1, 0
    %v57 = vsel %vm55, 1, 0
    %v58 = vcvt.s32.f32 %v56
    %v59 = vcvt.s32.f32 %v57
    %v60 = vadd.f32 %v58, 0.0
    %v61 = vadd.f32 %v59, 0.0
    %62 = vset.pattern.permute.xlu0 1
    %63 = vperm.xlu0 %62, %v44
    %v64 = vpop.permute.xlu0 %63
    %65 = vset.pattern.permute.xlu0 1
    %66 = vperm.xlu0 %65, %v45
    %v67 = vpop.permute.xlu0 %66
    %vm68 = vcmp.eq.s32.totalorder %v47, %v64
    %vm69 = vcmp.eq.s32.totalorder %v47, %v67
    %v70 = vsel %vm68, 1, 0
    %v71 = vsel %vm69, 1, 0
    %v72 = vcvt.s32.f32 %v70
    %v73 = vcvt.s32.f32 %v71
    %v74 = vadd.f32 %v60, %v72
    %v75 = vadd.f32 %v61, %v73
    %76 = vset.pattern.permute.xlu0 2
    %77 = vperm.xlu0 %76, %v44
    %v78 = vpop.permute.xlu0 %77
    %79 = vset.pattern.permute.xlu0 2
    %80 = vperm.xlu0 %79, %v45
    %v81 = vpop.permute.xlu0 %80
    %vm82 = vcmp.eq.s32.totalorder %v47, %v78
    %vm83 = vcmp.eq.s32.totalorder %v47, %v81
    %v84 = vsel %vm82, 1, 0
    %v85 = vsel %vm83, 1, 0
    %v86 = vcvt.s32.f32 %v84
    %v87 = vcvt.s32.f32 %v85
    %v88 = vadd.f32 %v74, %v86
    %v89 = vadd.f32 %v75, %v87
    %90 = vset.pattern.permute.xlu0 3
    %91 = vperm.xlu0 %90, %v44
    %v92 = vpop.permute.xlu0 %91
    %93 = vset.pattern.permute.xlu0 3
    %94 = vperm.xlu0 %93, %v45
    %v95 = vpop.permute.xlu0 %94
    %vm96 = vcmp.eq.s32.totalorder %v47, %v92
    %vm97 = vcmp.eq.s32.totalorder %v47, %v95
    %v98 = vsel %vm96, 1, 0
    %v99 = vsel %vm97, 1, 0
    %v100 = vcvt.s32.f32 %v98
    %v101 = vcvt.s32.f32 %v99
    %v102 = vadd.f32 %v88, %v100
    %v103 = vadd.f32 %v89, %v101
    %104 = vset.pattern.permute.xlu0 4
    %105 = vperm.xlu0 %104, %v44
    %v106 = vpop.permute.xlu0 %105
    %107 = vset.pattern.permute.xlu0 4
    %108 = vperm.xlu0 %107, %v45
    %v109 = vpop.permute.xlu0 %108
    %vm110 = vcmp.eq.s32.totalorder %v47, %v106
    %vm111 = vcmp.eq.s32.totalorder %v47, %v109
    %v112 = vsel %vm110, 1, 0
    %v113 = vsel %vm111, 1, 0
    %v114 = vcvt.s32.f32 %v112
    %v115 = vcvt.s32.f32 %v113
    %v116 = vadd.f32 %v102, %v114
    %v117 = vadd.f32 %v103, %v115
    %118 = vset.pattern.permute.xlu0 5
    %119 = vperm.xlu0 %118, %v44
    %v120 = vpop.permute.xlu0 %119
    %121 = vset.pattern.permute.xlu0 5
    %122 = vperm.xlu0 %121, %v45
    %v123 = vpop.permute.xlu0 %122
    %vm124 = vcmp.eq.s32.totalorder %v47, %v120
    %vm125 = vcmp.eq.s32.totalorder %v47, %v123
    %v126 = vsel %vm124, 1, 0
    %v127 = vsel %vm125, 1, 0
    %v128 = vcvt.s32.f32 %v126
    %v129 = vcvt.s32.f32 %v127
    %v130 = vadd.f32 %v116, %v128
    %v131 = vadd.f32 %v117, %v129
    %132 = vset.pattern.permute.xlu0 6
    %133 = vperm.xlu0 %132, %v44
    %v134 = vpop.permute.xlu0 %133
    %135 = vset.pattern.permute.xlu0 6
    %136 = vperm.xlu0 %135, %v45
    %v137 = vpop.permute.xlu0 %136
    %vm138 = vcmp.eq.s32.totalorder %v47, %v134
    %vm139 = vcmp.eq.s32.totalorder %v47, %v137
    %v140 = vsel %vm138, 1, 0
    %v141 = vsel %vm139, 1, 0
    %v142 = vcvt.s32.f32 %v140
    %v143 = vcvt.s32.f32 %v141
    %v144 = vadd.f32 %v130, %v142
    %v145 = vadd.f32 %v131, %v143
    %146 = vset.pattern.permute.xlu0 7
    %147 = vperm.xlu0 %146, %v44
    %v148 = vpop.permute.xlu0 %147
    %149 = vset.pattern.permute.xlu0 7
    %150 = vperm.xlu0 %149, %v45
    %v151 = vpop.permute.xlu0 %150
    %vm152 = vcmp.eq.s32.totalorder %v47, %v148
    %vm153 = vcmp.eq.s32.totalorder %v47, %v151
    %v154 = vsel %vm152, 1, 0
    %v155 = vsel %vm153, 1, 0
    %v156 = vcvt.s32.f32 %v154
    %v157 = vcvt.s32.f32 %v155
    %v158 = vadd.f32 %v144, %v156
    %v159 = vadd.f32 %v145, %v157
    %160 = vset.pattern.permute.xlu0 8
    %161 = vperm.xlu0 %160, %v44
    %v162 = vpop.permute.xlu0 %161
    %163 = vset.pattern.permute.xlu0 8
    %164 = vperm.xlu0 %163, %v45
    %v165 = vpop.permute.xlu0 %164
    %vm166 = vcmp.eq.s32.totalorder %v47, %v162
    %vm167 = vcmp.eq.s32.totalorder %v47, %v165
    %v168 = vsel %vm166, 1, 0
    %v169 = vsel %vm167, 1, 0
    %v170 = vcvt.s32.f32 %v168
    %v171 = vcvt.s32.f32 %v169
    %v172 = vadd.f32 %v158, %v170
    %v173 = vadd.f32 %v159, %v171
    %v174 = vld [vmem:[%s3] sm:$0xff]
    %v175 = vld [vmem:[%s3 + $0x8] sm:$0xff]
    %v176 = vld [vmem:[%s3 + $0x10] sm:$0xff]
    %v177 = vld [vmem:[%s3 + $0x18] sm:$0xff]
    %v178 = vld [vmem:[%s3 + $0x20] sm:$0xff]
    %v179 = vld [vmem:[%s3 + $0x28] sm:$0xff]
    %v180 = vld [vmem:[%s3 + $0x30] sm:$0xff]
    %v181 = vld [vmem:[%s3 + $0x38] sm:$0xff]
    %v182 = vld [vmem:[%s3 + $0x40] sm:$0xff]
    %v183 = vld [vmem:[%s3 + $0x48] sm:$0xff]
    %v184 = vld [vmem:[%s3 + $0x50] sm:$0xff]
    %v185 = vld [vmem:[%s3 + $0x58] sm:$0xff]
    %v186 = vld [vmem:[%s3 + $0x60] sm:$0xff]
    %v187 = vld [vmem:[%s3 + $0x68] sm:$0xff]
    %v188 = vld [vmem:[%s3 + $0x70] sm:$0xff]
    %v189 = vld [vmem:[%s3 + $0x78] sm:$0xff]
    %190 = vmatprep.subr.mxu0 0.0
    %191 = vmatpush1.msra.mxu0 %v174
    %192 = vmatprep.subr.mxu0 0.0
    %193 = vmatpush1.msra.mxu0 %v175
    %194 = vmatprep.subr.mxu0 0.0
    %195 = vmatpush1.msra.mxu0 %v176
    %196 = vmatprep.subr.mxu0 0.0
    %197 = vmatpush1.msra.mxu0 %v177
    %198 = vmatprep.subr.mxu0 0.0
    %199 = vmatpush1.msra.mxu0 %v178
    %200 = vmatprep.subr.mxu0 0.0
    %201 = vmatpush1.msra.mxu0 %v179
    %202 = vmatprep.subr.mxu0 0.0
    %203 = vmatpush1.msra.mxu0 %v180
    %204 = vmatprep.subr.mxu0 0.0
    %205 = vmatpush1.msra.mxu0 %v181
    %206 = vmatprep.subr.mxu0 0.0
    %207 = vmatpush1.msra.mxu0 %v182
    %208 = vmatprep.subr.mxu0 0.0
    %209 = vmatpush1.msra.mxu0 %v183
    %210 = vmatprep.subr.mxu0 0.0
    %211 = vmatpush1.msra.mxu0 %v184
    %212 = vmatprep.subr.mxu0 0.0
    %213 = vmatpush1.msra.mxu0 %v185
    %214 = vmatprep.subr.mxu0 0.0
    %215 = vmatpush1.msra.mxu0 %v186
    %216 = vmatprep.subr.mxu0 0.0
    %217 = vmatpush1.msra.mxu0 %v187
    %218 = vmatprep.subr.mxu0 0.0
    %219 = vmatpush1.msra.mxu0 %v188
    %220 = vmatprep.subr.mxu0 0.0
    %221 = vmatpush1.msra.mxu0 %v189
    %222 = vmatprep.subr.mxu0 0.0
    %223 = vmatpush1.msra.mxu0 0.0
    %224 = vmatprep.subr.mxu0 0.0
    %225 = vmatpush1.msra.mxu0 0.0
    %226 = vmatprep.subr.mxu0 0.0
    %227 = vmatpush1.msra.mxu0 0.0
    %228 = vmatprep.subr.mxu0 0.0
    %229 = vmatpush1.msra.mxu0 0.0
    %230 = vmatprep.subr.mxu0 0.0
    %231 = vmatpush1.msra.mxu0 0.0
    %232 = vmatprep.subr.mxu0 0.0
    %233 = vmatpush1.msra.mxu0 0.0
    %234 = vmatprep.subr.mxu0 0.0
    %235 = vmatpush1.msra.mxu0 0.0
    %236 = vmatprep.subr.mxu0 0.0
    %237 = vmatpush1.msra.mxu0 0.0
    %238 = vmatprep.subr.mxu0 0.0
    %239 = vmatpush1.msra.mxu0 0.0
    %240 = vmatprep.subr.mxu0 0.0
    %241 = vmatpush1.msra.mxu0 0.0
    %242 = vmatprep.subr.mxu0 0.0
    %243 = vmatpush1.msra.mxu0 0.0
    %244 = vmatprep.subr.mxu0 0.0
    %245 = vmatpush1.msra.mxu0 0.0
    %246 = vmatprep.subr.mxu0 0.0
    %247 = vmatpush1.msra.mxu0 0.0
    %248 = vmatprep.subr.mxu0 0.0
    %249 = vmatpush1.msra.mxu0 0.0
    %250 = vmatprep.subr.mxu0 0.0
    %251 = vmatpush1.msra.mxu0 0.0
    %252 = vmatprep.subr.mxu0 0.0
    %253 = vmatpush1.msra.mxu0 0.0
    %254 = vmatprep.mubr.f32.mxu0 0.0
    %255 = vmatmul.mubr.f32.gmra.mrb[0].mxu0 %v172
    %v256 = vpop.f32.mrb[0].mxu0
    %v257 = vadd.f32 0.0, %v256
    %v258 = vpop.f32.mrb[0].mxu0
    %259 = vmatprep.mubr.f32.mxu0 0.0
    %260 = vmatmul.mubr.f32.gmra.mrb[0].mxu0 %v173
    %v261 = vpop.f32.mrb[0].mxu0
    %v262 = vadd.f32 0.0, %v261
    %v263 = vpop.f32.mrb[0].mxu0
    %264 = vdwg.mxu0
    %v265 = vld [vmem:[%s4] sm:$0xff]
    %v266 = vld [vmem:[%s4 + $0x8] sm:$0xff]
    %v267 = vld [vmem:[%s4 + $0x10] sm:$0xff]
    %v268 = vld [vmem:[%s4 + $0x18] sm:$0xff]
    %v269 = vld [vmem:[%s5] sm:$0x1]
    %v271 = vlaneseq
    %v272 = vshrl.u32 %v271, 7
    %v273 = vsub.s32 0, %v272
    %v274 = vrot.slane %v269, %v273
    %vm276 = vcmask 261120
    %v278 = vsel %vm276, %v257, 0
    %v281 = vsel %vm276, %v262, 0
    %283 = vmatprep.subr.mxu0 0.0
    %284 = vmatpush1.msra.mxu0 %v265
    %285 = vmatprep.subr.mxu0 0.0
    %286 = vmatpush1.msra.mxu0 %v266
    %287 = vmatprep.subr.mxu0 0.0
    %288 = vmatpush1.msra.mxu0 %v267
    %289 = vmatprep.subr.mxu0 0.0
    %290 = vmatpush1.msra.mxu0 %v268
    %291 = vmatprep.subr.mxu0 0.0
    %292 = vmatpush1.msra.mxu0 0.0
    %293 = vmatprep.subr.mxu0 0.0
    %294 = vmatpush1.msra.mxu0 0.0
    %295 = vmatprep.subr.mxu0 0.0
    %296 = vmatpush1.msra.mxu0 0.0
    %297 = vmatprep.subr.mxu0 0.0
    %298 = vmatpush1.msra.mxu0 0.0
    %299 = vmatprep.subr.mxu0 0.0
    %300 = vmatpush1.msra.mxu0 0.0
    %301 = vmatprep.subr.mxu0 0.0
    %302 = vmatpush1.msra.mxu0 0.0
    %303 = vmatprep.subr.mxu0 0.0
    %304 = vmatpush1.msra.mxu0 0.0
    %305 = vmatprep.subr.mxu0 0.0
    %306 = vmatpush1.msra.mxu0 0.0
    %307 = vmatprep.subr.mxu0 0.0
    %308 = vmatpush1.msra.mxu0 0.0
    %309 = vmatprep.subr.mxu0 0.0
    %310 = vmatpush1.msra.mxu0 0.0
    %311 = vmatprep.subr.mxu0 0.0
    %312 = vmatpush1.msra.mxu0 0.0
    %313 = vmatprep.subr.mxu0 0.0
    %314 = vmatpush1.msra.mxu0 0.0
    %315 = vmatprep.subr.mxu0 0.0
    %316 = vmatpush1.msra.mxu0 0.0
    %317 = vmatprep.subr.mxu0 0.0
    %318 = vmatpush1.msra.mxu0 0.0
    %319 = vmatprep.subr.mxu0 0.0
    %320 = vmatpush1.msra.mxu0 0.0
    %321 = vmatprep.subr.mxu0 0.0
    %322 = vmatpush1.msra.mxu0 0.0
    %323 = vmatprep.subr.mxu0 0.0
    %324 = vmatpush1.msra.mxu0 0.0
    %325 = vmatprep.subr.mxu0 0.0
    %326 = vmatpush1.msra.mxu0 0.0
    %327 = vmatprep.subr.mxu0 0.0
    %328 = vmatpush1.msra.mxu0 0.0
    %329 = vmatprep.subr.mxu0 0.0
    %330 = vmatpush1.msra.mxu0 0.0
    %331 = vmatprep.subr.mxu0 0.0
    %332 = vmatpush1.msra.mxu0 0.0
    %333 = vmatprep.subr.mxu0 0.0
    %334 = vmatpush1.msra.mxu0 0.0
    %335 = vmatprep.subr.mxu0 0.0
    %336 = vmatpush1.msra.mxu0 0.0
    %337 = vmatprep.subr.mxu0 0.0
    %338 = vmatpush1.msra.mxu0 0.0
    %339 = vmatprep.subr.mxu0 0.0
    %340 = vmatpush1.msra.mxu0 0.0
    %341 = vmatprep.subr.mxu0 0.0
    %342 = vmatpush1.msra.mxu0 0.0
    %343 = vmatprep.subr.mxu0 0.0
    %344 = vmatpush1.msra.mxu0 0.0
    %345 = vmatprep.subr.mxu0 0.0
    %346 = vmatpush1.msra.mxu0 0.0
    %347 = vmatprep.mubr.f32.mxu0 0.0
    %348 = vmatmul.mubr.f32.gmra.mrb[0].mxu0 %v278
    %v349 = vpop.f32.mrb[0].mxu0
    %v350 = vadd.f32 %v274, %v349
    %v351 = vpop.f32.mrb[0].mxu0
    %352 = vmatprep.mubr.f32.mxu0 0.0
    %353 = vmatmul.mubr.f32.gmra.mrb[0].mxu0 %v281
    %v354 = vpop.f32.mrb[0].mxu0
    %v355 = vadd.f32 %v274, %v354
    %v356 = vpop.f32.mrb[0].mxu0
    %357 = vdwg.mxu0
    %v358 = vtanh.pop %v350
    %v359 = vtanh.pop %v355
    %v360 = vld [vmem:[#allocation2] sm:$0xff]
    %v361 = vld [vmem:[#allocation2 + $0x8] sm:$0xff]
    %v362 = vld [vmem:[#allocation2 + $0x10] sm:$0xff]
    %v363 = vld [vmem:[#allocation2 + $0x18] sm:$0xff]
    %v364 = vld [vmem:[#allocation2 + $0x20] sm:$0xff]
    %v365 = vld [vmem:[#allocation2 + $0x28] sm:$0xff]
    %v366 = vld [vmem:[#allocation2 + $0x30] sm:$0xff]
    %v367 = vld [vmem:[#allocation2 + $0x38] sm:$0xff]
    %v368 = vld [vmem:[#allocation2 + $0x40] sm:$0xff]
    %v369 = vld [vmem:[#allocation2 + $0x48] sm:$0xff]
    %v370 = vld [vmem:[#allocation2 + $0x50] sm:$0xff]
    %v371 = vld [vmem:[#allocation2 + $0x58] sm:$0xff]
    %v372 = vld [vmem:[#allocation2 + $0x60] sm:$0xff]
    %v373 = vld [vmem:[#allocation2 + $0x68] sm:$0xff]
    %v374 = vld [vmem:[#allocation2 + $0x70] sm:$0xff]
    %v375 = vld [vmem:[#allocation2 + $0x78] sm:$0xff]
    %v376 = vld [vmem:[#allocation2 + $0x80] sm:$0xff]
    %v377 = vld [vmem:[#allocation2 + $0x88] sm:$0xff]
    %v378 = vld [vmem:[#allocation2 + $0x90] sm:$0xff]
    %v379 = vld [vmem:[#allocation2 + $0x98] sm:$0xff]
    %v380 = vld [vmem:[#allocation2 + $0xa0] sm:$0xff]
    %v381 = vld [vmem:[#allocation2 + $0xa8] sm:$0xff]
    %v382 = vld [vmem:[#allocation2 + $0xb0] sm:$0xff]
    %v383 = vld [vmem:[#allocation2 + $0xb8] sm:$0xff]
    %v384 = vld [vmem:[#allocation2 + $0xc0] sm:$0xff]
    %v385 = vld [vmem:[#allocation2 + $0xc8] sm:$0xff]
    %v386 = vld [vmem:[#allocation2 + $0xd0] sm:$0xff]
    %v387 = vld [vmem:[#allocation2 + $0xd8] sm:$0xff]
    %v388 = vld [vmem:[#allocation2 + $0xe0] sm:$0xff]
    %v389 = vld [vmem:[#allocation2 + $0xe8] sm:$0xff]
    %v390 = vld [vmem:[#allocation2 + $0xf0] sm:$0xff]
    %v391 = vld [vmem:[#allocation2 + $0xf8] sm:$0xff]
    %v392 = vld [vmem:[#allocation2 + $0x100] sm:$0xff]
    %v393 = vld [vmem:[#allocation2 + $0x108] sm:$0xff]
    %v394 = vld [vmem:[#allocation2 + $0x110] sm:$0xff]
    %v395 = vld [vmem:[#allocation2 + $0x118] sm:$0xff]
    %v396 = vld [vmem:[%s7] sm:$0xff]
    %v397 = vld [vmem:[%s7 + $0x8] sm:$0x1]
    %v400 = vlaneseq
    %v401 = vshrl.u32 %v400, 7
    %v402 = vsub.s32 0, %v401
    %v403 = vrot.slane %v396, %v402
    %v404 = vlaneseq
    %v405 = vshrl.u32 %v404, 7
    %v406 = vsub.s32 1, %v405
    %v407 = vrot.slane %v396, %v406
    %v408 = vlaneseq
    %v409 = vshrl.u32 %v408, 7
    %v410 = vsub.s32 2, %v409
    %v411 = vrot.slane %v396, %v410
    %v412 = vlaneseq
    %v413 = vshrl.u32 %v412, 7
    %v414 = vsub.s32 3, %v413
    %v415 = vrot.slane %v396, %v414
    %v416 = vlaneseq
    %v417 = vshrl.u32 %v416, 7
    %v418 = vsub.s32 4, %v417
    %v419 = vrot.slane %v396, %v418
    %v420 = vlaneseq
    %v421 = vshrl.u32 %v420, 7
    %v422 = vsub.s32 5, %v421
    %v423 = vrot.slane %v396, %v422
    %v424 = vlaneseq
    %v425 = vshrl.u32 %v424, 7
    %v426 = vsub.s32 6, %v425
    %v427 = vrot.slane %v396, %v426
    %v428 = vlaneseq
    %v429 = vshrl.u32 %v428, 7
    %v430 = vsub.s32 7, %v429
    %v431 = vrot.slane %v396, %v430
    %v432 = vlaneseq
    %v433 = vshrl.u32 %v432, 7
    %v434 = vsub.s32 0, %v433
    %v435 = vrot.slane %v397, %v434
    %v446 = vsel %vm276, %v358, 0
    %v449 = vsel %vm276, %v359, 0
    %451 = vmatprep.subr.mxu0 %v361
    %452 = vmatpush1.msra.mxu0 %v360
    %453 = vmatprep.subr.mxu0 %v370
    %454 = vmatpush1.msra.mxu0 %v369
    %455 = vmatprep.subr.mxu0 %v379
    %456 = vmatpush1.msra.mxu0 %v378
    %457 = vmatprep.subr.mxu0 %v388
    %458 = vmatpush1.msra.mxu0 %v387
    %459 = vmatprep.subr.mxu0 0.0
    %460 = vmatpush1.msra.mxu0 0.0
    %461 = vmatprep.subr.mxu0 0.0
    %462 = vmatpush1.msra.mxu0 0.0
    %463 = vmatprep.subr.mxu0 0.0
    %464 = vmatpush1.msra.mxu0 0.0
    %465 = vmatprep.subr.mxu0 0.0
    %466 = vmatpush1.msra.mxu0 0.0
    %467 = vmatprep.subr.mxu0 0.0
    %468 = vmatpush1.msra.mxu0 0.0
    %469 = vmatprep.subr.mxu0 0.0
    %470 = vmatpush1.msra.mxu0 0.0
    %471 = vmatprep.subr.mxu0 0.0
    %472 = vmatpush1.msra.mxu0 0.0
    %473 = vmatprep.subr.mxu0 0.0
    %474 = vmatpush1.msra.mxu0 0.0
    %475 = vmatprep.subr.mxu0 0.0
    %476 = vmatpush1.msra.mxu0 0.0
    %477 = vmatprep.subr.mxu0 0.0
    %478 = vmatpush1.msra.mxu0 0.0
    %479 = vmatprep.subr.mxu0 0.0
    %480 = vmatpush1.msra.mxu0 0.0
    %481 = vmatprep.subr.mxu0 0.0
    %482 = vmatpush1.msra.mxu0 0.0
    %483 = vmatprep.subr.mxu0 0.0
    %484 = vmatpush1.msra.mxu0 0.0
    %485 = vmatprep.subr.mxu0 0.0
    %486 = vmatpush1.msra.mxu0 0.0
    %487 = vmatprep.subr.mxu0 0.0
    %488 = vmatpush1.msra.mxu0 0.0
    %489 = vmatprep.subr.mxu0 0.0
    %490 = vmatpush1.msra.mxu0 0.0
    %491 = vmatprep.subr.mxu0 0.0
    %492 = vmatpush1.msra.mxu0 0.0
    %493 = vmatprep.subr.mxu0 0.0
    %494 = vmatpush1.msra.mxu0 0.0
    %495 = vmatprep.subr.mxu0 0.0
    %496 = vmatpush1.msra.mxu0 0.0
    %497 = vmatprep.subr.mxu0 0.0
    %498 = vmatpush1.msra.mxu0 0.0
    %499 = vmatprep.subr.mxu0 0.0
    %500 = vmatpush1.msra.mxu0 0.0
    %501 = vmatprep.subr.mxu0 0.0
    %502 = vmatpush1.msra.mxu0 0.0
    %503 = vmatprep.subr.mxu0 0.0
    %504 = vmatpush1.msra.mxu0 0.0
    %505 = vmatprep.subr.mxu0 0.0
    %506 = vmatpush1.msra.mxu0 0.0
    %507 = vmatprep.subr.mxu0 0.0
    %508 = vmatpush1.msra.mxu0 0.0
    %509 = vmatprep.subr.mxu0 0.0
    %510 = vmatpush1.msra.mxu0 0.0
    %511 = vmatprep.subr.mxu0 0.0
    %512 = vmatpush1.msra.mxu0 0.0
    %513 = vmatprep.subr.mxu0 0.0
    %514 = vmatpush1.msra.mxu0 0.0
    %515 = vmatprep.mubr.f32.mxu0 0.0
    %516 = vmatmul.mubr.f32.gmra.mrb[0].mxu0 %v446
    %v517 = vpop.f32.mrb[0].mxu0
    %v518 = vadd.f32 %v403, %v517
    %v519 = vpop.f32.mrb[0].mxu0
    %v520 = vadd.f32 %v407, %v519
    %521 = vmatprep.mubr.f32.mxu0 0.0
    %522 = vmatmul.mubr.f32.gmra.mrb[0].mxu0 %v449
    %v523 = vpop.f32.mrb[0].mxu0
    %v524 = vadd.f32 %v403, %v523
    %v525 = vpop.f32.mrb[0].mxu0
    %v526 = vadd.f32 %v407, %v525
    %527 = vdwg.mxu0
    %528 = vmatprep.subr.mxu0 %v363
    %529 = vmatpush1.msra.mxu0 %v362
    %530 = vmatprep.subr.mxu0 %v372
    %531 = vmatpush1.msra.mxu0 %v371
    %532 = vmatprep.subr.mxu0 %v381
    %533 = vmatpush1.msra.mxu0 %v380
    %534 = vmatprep.subr.mxu0 %v390
    %535 = vmatpush1.msra.mxu0 %v389
    %536 = vmatprep.subr.mxu0 0.0
    %537 = vmatpush1.msra.mxu0 0.0
    %538 = vmatprep.subr.mxu0 0.0
    %539 = vmatpush1.msra.mxu0 0.0
    %540 = vmatprep.subr.mxu0 0.0
    %541 = vmatpush1.msra.mxu0 0.0
    %542 = vmatprep.subr.mxu0 0.0
    %543 = vmatpush1.msra.mxu0 0.0
    %544 = vmatprep.subr.mxu0 0.0
    %545 = vmatpush1.msra.mxu0 0.0
    %546 = vmatprep.subr.mxu0 0.0
    %547 = vmatpush1.msra.mxu0 0.0
    %548 = vmatprep.subr.mxu0 0.0
    %549 = vmatpush1.msra.mxu0 0.0
    %550 = vmatprep.subr.mxu0 0.0
    %551 = vmatpush1.msra.mxu0 0.0
    %552 = vmatprep.subr.mxu0 0.0
    %553 = vmatpush1.msra.mxu0 0.0
    %554 = vmatprep.subr.mxu0 0.0
    %555 = vmatpush1.msra.mxu0 0.0
    %556 = vmatprep.subr.mxu0 0.0
    %557 = vmatpush1.msra.mxu0 0.0
    %558 = vmatprep.subr.mxu0 0.0
    %559 = vmatpush1.msra.mxu0 0.0
    %560 = vmatprep.subr.mxu0 0.0
    %561 = vmatpush1.msra.mxu0 0.0
    %562 = vmatprep.subr.mxu0 0.0
    %563 = vmatpush1.msra.mxu0 0.0
    %564 = vmatprep.subr.mxu0 0.0
    %565 = vmatpush1.msra.mxu0 0.0
    %566 = vmatprep.subr.mxu0 0.0
    %567 = vmatpush1.msra.mxu0 0.0
    %568 = vmatprep.subr.mxu0 0.0
    %569 = vmatpush1.msra.mxu0 0.0
    %570 = vmatprep.subr.mxu0 0.0
    %571 = vmatpush1.msra.mxu0 0.0
    %572 = vmatprep.subr.mxu0 0.0
    %573 = vmatpush1.msra.mxu0 0.0
    %574 = vmatprep.subr.mxu0 0.0
    %575 = vmatpush1.msra.mxu0 0.0
    %576 = vmatprep.subr.mxu0 0.0
    %577 = vmatpush1.msra.mxu0 0.0
    %578 = vmatprep.subr.mxu0 0.0
    %579 = vmatpush1.msra.mxu0 0.0
    %580 = vmatprep.subr.mxu0 0.0
    %581 = vmatpush1.msra.mxu0 0.0
    %582 = vmatprep.subr.mxu0 0.0
    %583 = vmatpush1.msra.mxu0 0.0
    %584 = vmatprep.subr.mxu0 0.0
    %585 = vmatpush1.msra.mxu0 0.0
    %586 = vmatprep.subr.mxu0 0.0
    %587 = vmatpush1.msra.mxu0 0.0
    %588 = vmatprep.subr.mxu0 0.0
    %589 = vmatpush1.msra.mxu0 0.0
    %590 = vmatprep.subr.mxu0 0.0
    %591 = vmatpush1.msra.mxu0 0.0
    %592 = vmatprep.mubr.f32.mxu0 0.0
    %593 = vmatmul.mubr.f32.gmra.mrb[0].mxu0 %v446
    %v594 = vpop.f32.mrb[0].mxu0
    %v595 = vadd.f32 %v411, %v594
    %v596 = vpop.f32.mrb[0].mxu0
    %v597 = vadd.f32 %v415, %v596
    %598 = vmatprep.mubr.f32.mxu0 0.0
    %599 = vmatmul.mubr.f32.gmra.mrb[0].mxu0 %v449
    %v600 = vpop.f32.mrb[0].mxu0
    %v601 = vadd.f32 %v411, %v600
    %v602 = vpop.f32.mrb[0].mxu0
    %v603 = vadd.f32 %v415, %v602
    %604 = vdwg.mxu0
    %605 = vmatprep.subr.mxu0 %v365
    %606 = vmatpush1.msra.mxu0 %v364
    %607 = vmatprep.subr.mxu0 %v374
    %608 = vmatpush1.msra.mxu0 %v373
    %609 = vmatprep.subr.mxu0 %v383
    %610 = vmatpush1.msra.mxu0 %v382
    %611 = vmatprep.subr.mxu0 %v392
    %612 = vmatpush1.msra.mxu0 %v391
    %613 = vmatprep.subr.mxu0 0.0
    %614 = vmatpush1.msra.mxu0 0.0
    %615 = vmatprep.subr.mxu0 0.0
    %616 = vmatpush1.msra.mxu0 0.0
    %617 = vmatprep.subr.mxu0 0.0
    %618 = vmatpush1.msra.mxu0 0.0
    %619 = vmatprep.subr.mxu0 0.0
    %620 = vmatpush1.msra.mxu0 0.0
    %621 = vmatprep.subr.mxu0 0.0
    %622 = vmatpush1.msra.mxu0 0.0
    %623 = vmatprep.subr.mxu0 0.0
    %624 = vmatpush1.msra.mxu0 0.0
    %625 = vmatprep.subr.mxu0 0.0
    %626 = vmatpush1.msra.mxu0 0.0
    %627 = vmatprep.subr.mxu0 0.0
    %628 = vmatpush1.msra.mxu0 0.0
    %629 = vmatprep.subr.mxu0 0.0
    %630 = vmatpush1.msra.mxu0 0.0
    %631 = vmatprep.subr.mxu0 0.0
    %632 = vmatpush1.msra.mxu0 0.0
    %633 = vmatprep.subr.mxu0 0.0
    %634 = vmatpush1.msra.mxu0 0.0
    %635 = vmatprep.subr.mxu0 0.0
    %636 = vmatpush1.msra.mxu0 0.0
    %637 = vmatprep.subr.mxu0 0.0
    %638 = vmatpush1.msra.mxu0 0.0
    %639 = vmatprep.subr.mxu0 0.0
    %640 = vmatpush1.msra.mxu0 0.0
    %641 = vmatprep.subr.mxu0 0.0
    %642 = vmatpush1.msra.mxu0 0.0
    %643 = vmatprep.subr.mxu0 0.0
    %644 = vmatpush1.msra.mxu0 0.0
    %645 = vmatprep.subr.mxu0 0.0
    %646 = vmatpush1.msra.mxu0 0.0
    %647 = vmatprep.subr.mxu0 0.0
    %648 = vmatpush1.msra.mxu0 0.0
    %649 = vmatprep.subr.mxu0 0.0
    %650 = vmatpush1.msra.mxu0 0.0
    %651 = vmatprep.subr.mxu0 0.0
    %652 = vmatpush1.msra.mxu0 0.0
    %653 = vmatprep.subr.mxu0 0.0
    %654 = vmatpush1.msra.mxu0 0.0
    %655 = vmatprep.subr.mxu0 0.0
    %656 = vmatpush1.msra.mxu0 0.0
    %657 = vmatprep.subr.mxu0 0.0
    %658 = vmatpush1.msra.mxu0 0.0
    %659 = vmatprep.subr.mxu0 0.0
    %660 = vmatpush1.msra.mxu0 0.0
    %661 = vmatprep.subr.mxu0 0.0
    %662 = vmatpush1.msra.mxu0 0.0
    %663 = vmatprep.subr.mxu0 0.0
    %664 = vmatpush1.msra.mxu0 0.0
    %665 = vmatprep.subr.mxu0 0.0
    %666 = vmatpush1.msra.mxu0 0.0
    %667 = vmatprep.subr.mxu0 0.0
    %668 = vmatpush1.msra.mxu0 0.0
    %669 = vmatprep.mubr.f32.mxu0 0.0
    %670 = vmatmul.mubr.f32.gmra.mrb[0].mxu0 %v446
    %v671 = vpop.f32.mrb[0].mxu0
    %v672 = vadd.f32 %v419, %v671
    %v673 = vpop.f32.mrb[0].mxu0
    %v674 = vadd.f32 %v423, %v673
    %675 = vmatprep.mubr.f32.mxu0 0.0
    %676 = vmatmul.mubr.f32.gmra.mrb[0].mxu0 %v449
    %v677 = vpop.f32.mrb[0].mxu0
    %v678 = vadd.f32 %v419, %v677
    %v679 = vpop.f32.mrb[0].mxu0
    %v680 = vadd.f32 %v423, %v679
    %681 = vdwg.mxu0
    %682 = vmatprep.subr.mxu0 %v367
    %683 = vmatpush1.msra.mxu0 %v366
    %684 = vmatprep.subr.mxu0 %v376
    %685 = vmatpush1.msra.mxu0 %v375
    %686 = vmatprep.subr.mxu0 %v385
    %687 = vmatpush1.msra.mxu0 %v384
    %688 = vmatprep.subr.mxu0 %v394
    %689 = vmatpush1.msra.mxu0 %v393
    %690 = vmatprep.subr.mxu0 0.0
    %691 = vmatpush1.msra.mxu0 0.0
    %692 = vmatprep.subr.mxu0 0.0
    %693 = vmatpush1.msra.mxu0 0.0
    %694 = vmatprep.subr.mxu0 0.0
    %695 = vmatpush1.msra.mxu0 0.0
    %696 = vmatprep.subr.mxu0 0.0
    %697 = vmatpush1.msra.mxu0 0.0
    %698 = vmatprep.subr.mxu0 0.0
    %699 = vmatpush1.msra.mxu0 0.0
    %700 = vmatprep.subr.mxu0 0.0
    %701 = vmatpush1.msra.mxu0 0.0
    %702 = vmatprep.subr.mxu0 0.0
    %703 = vmatpush1.msra.mxu0 0.0
    %704 = vmatprep.subr.mxu0 0.0
    %705 = vmatpush1.msra.mxu0 0.0
    %706 = vmatprep.subr.mxu0 0.0
    %707 = vmatpush1.msra.mxu0 0.0
    %708 = vmatprep.subr.mxu0 0.0
    %709 = vmatpush1.msra.mxu0 0.0
    %710 = vmatprep.subr.mxu0 0.0
    %711 = vmatpush1.msra.mxu0 0.0
    %712 = vmatprep.subr.mxu0 0.0
    %713 = vmatpush1.msra.mxu0 0.0
    %714 = vmatprep.subr.mxu0 0.0
    %715 = vmatpush1.msra.mxu0 0.0
    %716 = vmatprep.subr.mxu0 0.0
    %717 = vmatpush1.msra.mxu0 0.0
    %718 = vmatprep.subr.mxu0 0.0
    %719 = vmatpush1.msra.mxu0 0.0
    %720 = vmatprep.subr.mxu0 0.0
    %721 = vmatpush1.msra.mxu0 0.0
    %722 = vmatprep.subr.mxu0 0.0
    %723 = vmatpush1.msra.mxu0 0.0
    %724 = vmatprep.subr.mxu0 0.0
    %725 = vmatpush1.msra.mxu0 0.0
    %726 = vmatprep.subr.mxu0 0.0
    %727 = vmatpush1.msra.mxu0 0.0
    %728 = vmatprep.subr.mxu0 0.0
    %729 = vmatpush1.msra.mxu0 0.0
    %730 = vmatprep.subr.mxu0 0.0
    %731 = vmatpush1.msra.mxu0 0.0
    %732 = vmatprep.subr.mxu0 0.0
    %733 = vmatpush1.msra.mxu0 0.0
    %734 = vmatprep.subr.mxu0 0.0
    %735 = vmatpush1.msra.mxu0 0.0
    %736 = vmatprep.subr.mxu0 0.0
    %737 = vmatpush1.msra.mxu0 0.0
    %738 = vmatprep.subr.mxu0 0.0
    %739 = vmatpush1.msra.mxu0 0.0
    %740 = vmatprep.subr.mxu0 0.0
    %741 = vmatpush1.msra.mxu0 0.0
    %742 = vmatprep.subr.mxu0 0.0
    %743 = vmatpush1.msra.mxu0 0.0
    %744 = vmatprep.subr.mxu0 0.0
    %745 = vmatpush1.msra.mxu0 0.0
    %746 = vmatprep.mubr.f32.mxu0 0.0
    %747 = vmatmul.mubr.f32.gmra.mrb[0].mxu0 %v446
    %v748 = vpop.f32.mrb[0].mxu0
    %v749 = vadd.f32 %v427, %v748
    %v750 = vpop.f32.mrb[0].mxu0
    %v751 = vadd.f32 %v431, %v750
    %752 = vmatprep.mubr.f32.mxu0 0.0
    %753 = vmatmul.mubr.f32.gmra.mrb[0].mxu0 %v449
    %v754 = vpop.f32.mrb[0].mxu0
    %v755 = vadd.f32 %v427, %v754
    %v756 = vpop.f32.mrb[0].mxu0
    %v757 = vadd.f32 %v431, %v756
    %758 = vdwg.mxu0
    %759 = vmatprep.subr.mxu0 0.0
    %760 = vmatpush1.msra.mxu0 %v368
    %761 = vmatprep.subr.mxu0 0.0
    %762 = vmatpush1.msra.mxu0 %v377
    %763 = vmatprep.subr.mxu0 0.0
    %764 = vmatpush1.msra.mxu0 %v386
    %765 = vmatprep.subr.mxu0 0.0
    %766 = vmatpush1.msra.mxu0 %v395
    %767 = vmatprep.subr.mxu0 0.0
    %768 = vmatpush1.msra.mxu0 0.0
    %769 = vmatprep.subr.mxu0 0.0
    %770 = vmatpush1.msra.mxu0 0.0
    %771 = vmatprep.subr.mxu0 0.0
    %772 = vmatpush1.msra.mxu0 0.0
    %773 = vmatprep.subr.mxu0 0.0
    %774 = vmatpush1.msra.mxu0 0.0
    %775 = vmatprep.subr.mxu0 0.0
    %776 = vmatpush1.msra.mxu0 0.0
    %777 = vmatprep.subr.mxu0 0.0
    %778 = vmatpush1.msra.mxu0 0.0
    %779 = vmatprep.subr.mxu0 0.0
    %780 = vmatpush1.msra.mxu0 0.0
    %781 = vmatprep.subr.mxu0 0.0
    %782 = vmatpush1.msra.mxu0 0.0
    %783 = vmatprep.subr.mxu0 0.0
    %784 = vmatpush1.msra.mxu0 0.0
    %785 = vmatprep.subr.mxu0 0.0
    %786 = vmatpush1.msra.mxu0 0.0
    %787 = vmatprep.subr.mxu0 0.0
    %788 = vmatpush1.msra.mxu0 0.0
    %789 = vmatprep.subr.mxu0 0.0
    %790 = vmatpush1.msra.mxu0 0.0
    %791 = vmatprep.subr.mxu0 0.0
    %792 = vmatpush1.msra.mxu0 0.0
    %793 = vmatprep.subr.mxu0 0.0
    %794 = vmatpush1.msra.mxu0 0.0
    %795 = vmatprep.subr.mxu0 0.0
    %796 = vmatpush1.msra.mxu0 0.0
    %797 = vmatprep.subr.mxu0 0.0
    %798 = vmatpush1.msra.mxu0 0.0
    %799 = vmatprep.subr.mxu0 0.0
    %800 = vmatpush1.msra.mxu0 0.0
    %801 = vmatprep.subr.mxu0 0.0
    %802 = vmatpush1.msra.mxu0 0.0
    %803 = vmatprep.subr.mxu0 0.0
    %804 = vmatpush1.msra.mxu0 0.0
    %805 = vmatprep.subr.mxu0 0.0
    %806 = vmatpush1.msra.mxu0 0.0
    %807 = vmatprep.subr.mxu0 0.0
    %808 = vmatpush1.msra.mxu0 0.0
    %809 = vmatprep.subr.mxu0 0.0
    %810 = vmatpush1.msra.mxu0 0.0
    %811 = vmatprep.subr.mxu0 0.0
    %812 = vmatpush1.msra.mxu0 0.0
    %813 = vmatprep.subr.mxu0 0.0
    %814 = vmatpush1.msra.mxu0 0.0
    %815 = vmatprep.subr.mxu0 0.0
    %816 = vmatpush1.msra.mxu0 0.0
    %817 = vmatprep.subr.mxu0 0.0
    %818 = vmatpush1.msra.mxu0 0.0
    %819 = vmatprep.subr.mxu0 0.0
    %820 = vmatpush1.msra.mxu0 0.0
    %821 = vmatprep.subr.mxu0 0.0
    %822 = vmatpush1.msra.mxu0 0.0
    %823 = vmatprep.mubr.f32.mxu0 0.0
    %824 = vmatmul.mubr.f32.gmra.mrb[0].mxu0 %v446
    %v825 = vpop.f32.mrb[0].mxu0
    %v826 = vadd.f32 %v435, %v825
    %v827 = vpop.f32.mrb[0].mxu0
    %828 = vmatprep.mubr.f32.mxu0 0.0
    %829 = vmatmul.mubr.f32.gmra.mrb[0].mxu0 %v449
    %v830 = vpop.f32.mrb[0].mxu0
    %v831 = vadd.f32 %v435, %v830
    %v832 = vpop.f32.mrb[0].mxu0
    %833 = vdwg.mxu0
    %v834 = vld [vmem:[%s1] sm:$0xff]
    %v835 = vld [vmem:[%s1 + $0x8] sm:$0xff]
    %v836 = vld [vmem:[%s2] sm:$0xff]
    %v837 = vld [vmem:[%s2 + $0x8] sm:$0xff]
    %v838 = vlaneseq
    %v839 = vshrl.u32 %v838, 7
    %840 = vmax.xlane.f32.xlu0 %v518
    %v841 = vpop.xlane.xlu0 %840
    %842 = vmax.xlane.f32.xlu0 %v524
    %v843 = vpop.xlane.xlu0 %842
    %v844 = vsub.f32 %v518, %v841
    %v845 = vsub.f32 %v524, %v843
    %v846 = vmul.f32 %v844, 1.442695
    %v847 = vpow.pop %v846
    %v848 = vmul.f32 %v845, 1.442695
    %v849 = vpow.pop %v848
    %850 = vadd.xlane.f32.xlu0 %v847
    %v851 = vpop.xlane.xlu0 %850
    %852 = vadd.xlane.f32.xlu0 %v849
    %v853 = vpop.xlane.xlu0 %852
    %v854 = vlog2.pop %v851
    %v855 = vmul.f32 %v854, 0.6931472
    %v856 = vlog2.pop %v853
    %v857 = vmul.f32 %v856, 0.6931472
    %v858 = vadd.f32 %v841, %v855
    %v859 = vadd.f32 %v843, %v857
    %860 = vset.pattern.permute.xlu0 0
    %861 = vperm.xlu0 %860, %v834
    %v862 = vpop.permute.xlu0 %861
    %863 = vset.pattern.permute.xlu0 0
    %864 = vperm.xlu0 %863, %v835
    %v865 = vpop.permute.xlu0 %864
    %vm866 = vcmp.eq.s32.totalorder %v47, %v862
    %vm867 = vcmp.eq.s32.totalorder %v47, %v865
    %v868 = vsel %vm866, %v518, 0.0
    %v869 = vsel %vm867, %v524, 0.0
    %870 = vadd.xlane.f32.xlu0 %v868
    %v871 = vpop.xlane.xlu0 %870
    %872 = vadd.xlane.f32.xlu0 %v869
    %v873 = vpop.xlane.xlu0 %872
    %v874 = vsub.f32 %v858, %v871
    %v875 = vsub.f32 %v859, %v873
    %v876 = vmul.f32 %v874, %v836
    %v877 = vmul.f32 %v875, %v837
    %vm878 = vcmask 7168
    %v879 = vsel %vm878, %v876, 0.0
    %v880 = vsel %vm878, %v877, 0.0
    %v881 = vadd.f32 %v879, %v880
    %882 = vadd.xlane.f32.xlu0 %v881
    %v883 = vpop.xlane.xlu0 %882
    %v884 = vrot.slane %v883, 4
    %v885 = vadd.f32 %v883, %v884
    %v886 = vrot.slane %v885, 2
    %v887 = vadd.f32 %v885, %v886
    %v888 = vrot.slane %v887, 1
    %v889 = vadd.f32 %v887, %v888
    %s890 = vtos %v889
    %v891 = vsel %vm878, %v836, 0.0
    %v892 = vsel %vm878, %v837, 0.0
    %v893 = vadd.f32 %v891, %v892
    %894 = vadd.xlane.f32.xlu0 %v893
    %v895 = vpop.xlane.xlu0 %894
    %v896 = vrot.slane %v895, 4
    %v897 = vadd.f32 %v895, %v896
    %v898 = vrot.slane %v897, 2
    %v899 = vadd.f32 %v897, %v898
    %v900 = vrot.slane %v899, 1
    %v901 = vadd.f32 %v899, %v900
    %s902 = vtos %v901
    %vm903 = vcmp.eq.s32.totalorder %v839, 0
    %vm904 = vcmp.eq.s32.totalorder %v47, 0
    %vm905 = vmand %vm903, %vm904
    %v906 = vstv %s890
    %v907 = vsel %vm905, %v906, 0.0
    %vm908 = vcmp.eq.s32.totalorder %v839, 1
    %vm909 = vmand %vm908, %vm904
    %v910 = vstv %s902
    %v911 = vsel %vm909, %v910, %v907
    %912 = vmax.xlane.f32.xlu0 %v520
    %v913 = vpop.xlane.xlu0 %912
    %914 = vmax.xlane.f32.xlu0 %v526
    %v915 = vpop.xlane.xlu0 %914
    %v916 = vsub.f32 %v520, %v913
    %v917 = vsub.f32 %v526, %v915
    %v918 = vmul.f32 %v916, 1.442695
    %v919 = vpow.pop %v918
    %v920 = vmul.f32 %v917, 1.442695
    %v921 = vpow.pop %v920
    %922 = vadd.xlane.f32.xlu0 %v919
    %v923 = vpop.xlane.xlu0 %922
    %924 = vadd.xlane.f32.xlu0 %v921
    %v925 = vpop.xlane.xlu0 %924
    %v926 = vlog2.pop %v923
    %v927 = vmul.f32 %v926, 0.6931472
    %v928 = vlog2.pop %v925
    %v929 = vmul.f32 %v928, 0.6931472
    %v930 = vadd.f32 %v913, %v927
    %v931 = vadd.f32 %v915, %v929
    %932 = vset.pattern.permute.xlu0 1
    %933 = vperm.xlu0 %932, %v834
    %v934 = vpop.permute.xlu0 %933
    %935 = vset.pattern.permute.xlu0 1
    %936 = vperm.xlu0 %935, %v835
    %v937 = vpop.permute.xlu0 %936
    %vm938 = vcmp.eq.s32.totalorder %v47, %v934
    %vm939 = vcmp.eq.s32.totalorder %v47, %v937
    %v940 = vsel %vm938, %v520, 0.0
    %v941 = vsel %vm939, %v526, 0.0
    %942 = vadd.xlane.f32.xlu0 %v940
    %v943 = vpop.xlane.xlu0 %942
    %944 = vadd.xlane.f32.xlu0 %v941
    %v945 = vpop.xlane.xlu0 %944
    %v946 = vsub.f32 %v930, %v943
    %v947 = vsub.f32 %v931, %v945
    %v948 = vmul.f32 %v946, %v836
    %v949 = vmul.f32 %v947, %v837
    %952 = vrot.lane.b32.xlu0 %v948, 127
    %v953 = vpop.permute.xlu0 %952
    %954 = vrot.lane.b32.xlu0 %v949, 127
    %v955 = vpop.permute.xlu0 %954
    %v958 = vsel %vm878, %v953, 0.0
    %v959 = vsel %vm878, %v955, 0.0
    %v960 = vadd.f32 %v958, %v959
    %961 = vadd.xlane.f32.xlu0 %v960
    %v962 = vpop.xlane.xlu0 %961
    %v963 = vrot.slane %v962, 4
    %v964 = vadd.f32 %v962, %v963
    %v965 = vrot.slane %v964, 2
    %v966 = vadd.f32 %v964, %v965
    %v967 = vrot.slane %v966, 1
    %v968 = vadd.f32 %v966, %v967
    %s969 = vtos %v968
    %972 = vrot.lane.b32.xlu0 %v836, 127
    %v973 = vpop.permute.xlu0 %972
    %974 = vrot.lane.b32.xlu0 %v837, 127
    %v975 = vpop.permute.xlu0 %974
    %v978 = vsel %vm878, %v973, 0.0
    %v979 = vsel %vm878, %v975, 0.0
    %v980 = vadd.f32 %v978, %v979
    %981 = vadd.xlane.f32.xlu0 %v980
    %v982 = vpop.xlane.xlu0 %981
    %v983 = vrot.slane %v982, 4
    %v984 = vadd.f32 %v982, %v983
    %v985 = vrot.slane %v984, 2
    %v986 = vadd.f32 %v984, %v985
    %v987 = vrot.slane %v986, 1
    %v988 = vadd.f32 %v986, %v987
    %s989 = vtos %v988
    %vm990 = vcmp.eq.s32.totalorder %v47, 1
    %vm991 = vmand %vm903, %vm990
    %v992 = vstv %s969
    %v993 = vsel %vm991, %v992, %v911
    %vm994 = vmand %vm908, %vm990
    %v995 = vstv %s989
    %v996 = vsel %vm994, %v995, %v993
    %997 = vmax.xlane.f32.xlu0 %v595
    %v998 = vpop.xlane.xlu0 %997
    %999 = vmax.xlane.f32.xlu0 %v601
    %v1000 = vpop.xlane.xlu0 %999
    %v1001 = vsub.f32 %v595, %v998
    %v1002 = vsub.f32 %v601, %v1000
    %v1003 = vmul.f32 %v1001, 1.442695
    %v1004 = vpow.pop %v1003
    %v1005 = vmul.f32 %v1002, 1.442695
    %v1006 = vpow.pop %v1005
    %1007 = vadd.xlane.f32.xlu0 %v1004
    %v1008 = vpop.xlane.xlu0 %1007
    %1009 = vadd.xlane.f32.xlu0 %v1006
    %v1010 = vpop.xlane.xlu0 %1009
    %v1011 = vlog2.pop %v1008
    %v1012 = vmul.f32 %v1011, 0.6931472
    %v1013 = vlog2.pop %v1010
    %v1014 = vmul.f32 %v1013, 0.6931472
    %v1015 = vadd.f32 %v998, %v1012
    %v1016 = vadd.f32 %v1000, %v1014
    %1017 = vset.pattern.permute.xlu0 2
    %1018 = vperm.xlu0 %1017, %v834
    %v1019 = vpop.permute.xlu0 %1018
    %1020 = vset.pattern.permute.xlu0 2
    %1021 = vperm.xlu0 %1020, %v835
    %v1022 = vpop.permute.xlu0 %1021
    %vm1023 = vcmp.eq.s32.totalorder %v47, %v1019
    %vm1024 = vcmp.eq.s32.totalorder %v47, %v1022
    %v1025 = vsel %vm1023, %v595, 0.0
    %v1026 = vsel %vm1024, %v601, 0.0
    %1027 = vadd.xlane.f32.xlu0 %v1025
    %v1028 = vpop.xlane.xlu0 %1027
    %1029 = vadd.xlane.f32.xlu0 %v1026
    %v1030 = vpop.xlane.xlu0 %1029
    %v1031 = vsub.f32 %v1015, %v1028
    %v1032 = vsub.f32 %v1016, %v1030
    %v1033 = vmul.f32 %v1031, %v836
    %v1034 = vmul.f32 %v1032, %v837
    %1037 = vrot.lane.b32.xlu0 %v1033, 126
    %v1038 = vpop.permute.xlu0 %1037
    %1039 = vrot.lane.b32.xlu0 %v1034, 126
    %v1040 = vpop.permute.xlu0 %1039
    %v1043 = vsel %vm878, %v1038, 0.0
    %v1044 = vsel %vm878, %v1040, 0.0
    %v1045 = vadd.f32 %v1043, %v1044
    %1046 = vadd.xlane.f32.xlu0 %v1045
    %v1047 = vpop.xlane.xlu0 %1046
    %v1048 = vrot.slane %v1047, 4
    %v1049 = vadd.f32 %v1047, %v1048
    %v1050 = vrot.slane %v1049, 2
    %v1051 = vadd.f32 %v1049, %v1050
    %v1052 = vrot.slane %v1051, 1
    %v1053 = vadd.f32 %v1051, %v1052
    %s1054 = vtos %v1053
    %1055 = vrot.lane.b32.xlu0 %v836, 126
    %v1056 = vpop.permute.xlu0 %1055
    %1057 = vrot.lane.b32.xlu0 %v837, 126
    %v1058 = vpop.permute.xlu0 %1057
    %v1061 = vsel %vm878, %v1056, 0.0
    %v1062 = vsel %vm878, %v1058, 0.0
    %v1063 = vadd.f32 %v1061, %v1062
    %1064 = vadd.xlane.f32.xlu0 %v1063
    %v1065 = vpop.xlane.xlu0 %1064
    %v1066 = vrot.slane %v1065, 4
    %v1067 = vadd.f32 %v1065, %v1066
    %v1068 = vrot.slane %v1067, 2
    %v1069 = vadd.f32 %v1067, %v1068
    %v1070 = vrot.slane %v1069, 1
    %v1071 = vadd.f32 %v1069, %v1070
    %s1072 = vtos %v1071
    %vm1073 = vcmp.eq.s32.totalorder %v47, 2
    %vm1074 = vmand %vm903, %vm1073
    %v1075 = vstv %s1054
    %v1076 = vsel %vm1074, %v1075, %v996
    %vm1077 = vmand %vm908, %vm1073
    %v1078 = vstv %s1072
    %v1079 = vsel %vm1077, %v1078, %v1076
    %1080 = vmax.xlane.f32.xlu0 %v597
    %v1081 = vpop.xlane.xlu0 %1080
    %1082 = vmax.xlane.f32.xlu0 %v603
    %v1083 = vpop.xlane.xlu0 %1082
    %v1084 = vsub.f32 %v597, %v1081
    %v1085 = vsub.f32 %v603, %v1083
    %v1086 = vmul.f32 %v1084, 1.442695
    %v1087 = vpow.pop %v1086
    %v1088 = vmul.f32 %v1085, 1.442695
    %v1089 = vpow.pop %v1088
    %1090 = vadd.xlane.f32.xlu0 %v1087
    %v1091 = vpop.xlane.xlu0 %1090
    %1092 = vadd.xlane.f32.xlu0 %v1089
    %v1093 = vpop.xlane.xlu0 %1092
    %v1094 = vlog2.pop %v1091
    %v1095 = vmul.f32 %v1094, 0.6931472
    %v1096 = vlog2.pop %v1093
    %v1097 = vmul.f32 %v1096, 0.6931472
    %v1098 = vadd.f32 %v1081, %v1095
    %v1099 = vadd.f32 %v1083, %v1097
    %1100 = vset.pattern.permute.xlu0 3
    %1101 = vperm.xlu0 %1100, %v834
    %v1102 = vpop.permute.xlu0 %1101
    %1103 = vset.pattern.permute.xlu0 3
    %1104 = vperm.xlu0 %1103, %v835
    %v1105 = vpop.permute.xlu0 %1104
    %vm1106 = vcmp.eq.s32.totalorder %v47, %v1102
    %vm1107 = vcmp.eq.s32.totalorder %v47, %v1105
    %v1108 = vsel %vm1106, %v597, 0.0
    %v1109 = vsel %vm1107, %v603, 0.0
    %1110 = vadd.xlane.f32.xlu0 %v1108
    %v1111 = vpop.xlane.xlu0 %1110
    %1112 = vadd.xlane.f32.xlu0 %v1109
    %v1113 = vpop.xlane.xlu0 %1112
    %v1114 = vsub.f32 %v1098, %v1111
    %v1115 = vsub.f32 %v1099, %v1113
    %v1116 = vmul.f32 %v1114, %v836
    %v1117 = vmul.f32 %v1115, %v837
    %1120 = vrot.lane.b32.xlu0 %v1116, 125
    %v1121 = vpop.permute.xlu0 %1120
    %1122 = vrot.lane.b32.xlu0 %v1117, 125
    %v1123 = vpop.permute.xlu0 %1122
    %v1126 = vsel %vm878, %v1121, 0.0
    %v1127 = vsel %vm878, %v1123, 0.0
    %v1128 = vadd.f32 %v1126, %v1127
    %1129 = vadd.xlane.f32.xlu0 %v1128
    %v1130 = vpop.xlane.xlu0 %1129
    %v1131 = vrot.slane %v1130, 4
    %v1132 = vadd.f32 %v1130, %v1131
    %v1133 = vrot.slane %v1132, 2
    %v1134 = vadd.f32 %v1132, %v1133
    %v1135 = vrot.slane %v1134, 1
    %v1136 = vadd.f32 %v1134, %v1135
    %s1137 = vtos %v1136
    %1138 = vrot.lane.b32.xlu0 %v836, 125
    %v1139 = vpop.permute.xlu0 %1138
    %1140 = vrot.lane.b32.xlu0 %v837, 125
    %v1141 = vpop.permute.xlu0 %1140
    %v1144 = vsel %vm878, %v1139, 0.0
    %v1145 = vsel %vm878, %v1141, 0.0
    %v1146 = vadd.f32 %v1144, %v1145
    %1147 = vadd.xlane.f32.xlu0 %v1146
    %v1148 = vpop.xlane.xlu0 %1147
    %v1149 = vrot.slane %v1148, 4
    %v1150 = vadd.f32 %v1148, %v1149
    %v1151 = vrot.slane %v1150, 2
    %v1152 = vadd.f32 %v1150, %v1151
    %v1153 = vrot.slane %v1152, 1
    %v1154 = vadd.f32 %v1152, %v1153
    %s1155 = vtos %v1154
    %vm1156 = vcmp.eq.s32.totalorder %v47, 3
    %vm1157 = vmand %vm903, %vm1156
    %v1158 = vstv %s1137
    %v1159 = vsel %vm1157, %v1158, %v1079
    %vm1160 = vmand %vm908, %vm1156
    %v1161 = vstv %s1155
    %v1162 = vsel %vm1160, %v1161, %v1159
    %1163 = vmax.xlane.f32.xlu0 %v672
    %v1164 = vpop.xlane.xlu0 %1163
    %1165 = vmax.xlane.f32.xlu0 %v678
    %v1166 = vpop.xlane.xlu0 %1165
    %v1167 = vsub.f32 %v672, %v1164
    %v1168 = vsub.f32 %v678, %v1166
    %v1169 = vmul.f32 %v1167, 1.442695
    %v1170 = vpow.pop %v1169
    %v1171 = vmul.f32 %v1168, 1.442695
    %v1172 = vpow.pop %v1171
    %1173 = vadd.xlane.f32.xlu0 %v1170
    %v1174 = vpop.xlane.xlu0 %1173
    %1175 = vadd.xlane.f32.xlu0 %v1172
    %v1176 = vpop.xlane.xlu0 %1175
    %v1177 = vlog2.pop %v1174
    %v1178 = vmul.f32 %v1177, 0.6931472
    %v1179 = vlog2.pop %v1176
    %v1180 = vmul.f32 %v1179, 0.6931472
    %v1181 = vadd.f32 %v1164, %v1178
    %v1182 = vadd.f32 %v1166, %v1180
    %1183 = vset.pattern.permute.xlu0 4
    %1184 = vperm.xlu0 %1183, %v834
    %v1185 = vpop.permute.xlu0 %1184
    %1186 = vset.pattern.permute.xlu0 4
    %1187 = vperm.xlu0 %1186, %v835
    %v1188 = vpop.permute.xlu0 %1187
    %vm1189 = vcmp.eq.s32.totalorder %v47, %v1185
    %vm1190 = vcmp.eq.s32.totalorder %v47, %v1188
    %v1191 = vsel %vm1189, %v672, 0.0
    %v1192 = vsel %vm1190, %v678, 0.0
    %1193 = vadd.xlane.f32.xlu0 %v1191
    %v1194 = vpop.xlane.xlu0 %1193
    %1195 = vadd.xlane.f32.xlu0 %v1192
    %v1196 = vpop.xlane.xlu0 %1195
    %v1197 = vsub.f32 %v1181, %v1194
    %v1198 = vsub.f32 %v1182, %v1196
    %v1199 = vmul.f32 %v1197, %v836
    %v1200 = vmul.f32 %v1198, %v837
    %1203 = vrot.lane.b32.xlu0 %v1199, 124
    %v1204 = vpop.permute.xlu0 %1203
    %1205 = vrot.lane.b32.xlu0 %v1200, 124
    %v1206 = vpop.permute.xlu0 %1205
    %v1209 = vsel %vm878, %v1204, 0.0
    %v1210 = vsel %vm878, %v1206, 0.0
    %v1211 = vadd.f32 %v1209, %v1210
    %1212 = vadd.xlane.f32.xlu0 %v1211
    %v1213 = vpop.xlane.xlu0 %1212
    %v1214 = vrot.slane %v1213, 4
    %v1215 = vadd.f32 %v1213, %v1214
    %v1216 = vrot.slane %v1215, 2
    %v1217 = vadd.f32 %v1215, %v1216
    %v1218 = vrot.slane %v1217, 1
    %v1219 = vadd.f32 %v1217, %v1218
    %s1220 = vtos %v1219
    %1221 = vrot.lane.b32.xlu0 %v836, 124
    %v1222 = vpop.permute.xlu0 %1221
    %1223 = vrot.lane.b32.xlu0 %v837, 124
    %v1224 = vpop.permute.xlu0 %1223
    %v1227 = vsel %vm878, %v1222, 0.0
    %v1228 = vsel %vm878, %v1224, 0.0
    %v1229 = vadd.f32 %v1227, %v1228
    %1230 = vadd.xlane.f32.xlu0 %v1229
    %v1231 = vpop.xlane.xlu0 %1230
    %v1232 = vrot.slane %v1231, 4
    %v1233 = vadd.f32 %v1231, %v1232
    %v1234 = vrot.slane %v1233, 2
    %v1235 = vadd.f32 %v1233, %v1234
    %v1236 = vrot.slane %v1235, 1
    %v1237 = vadd.f32 %v1235, %v1236
    %s1238 = vtos %v1237
    %vm1239 = vcmp.eq.s32.totalorder %v47, 4
    %vm1240 = vmand %vm903, %vm1239
    %v1241 = vstv %s1220
    %v1242 = vsel %vm1240, %v1241, %v1162
    %vm1243 = vmand %vm908, %vm1239
    %v1244 = vstv %s1238
    %v1245 = vsel %vm1243, %v1244, %v1242
    %1246 = vmax.xlane.f32.xlu0 %v674
    %v1247 = vpop.xlane.xlu0 %1246
    %1248 = vmax.xlane.f32.xlu0 %v680
    %v1249 = vpop.xlane.xlu0 %1248
    %v1250 = vsub.f32 %v674, %v1247
    %v1251 = vsub.f32 %v680, %v1249
    %v1252 = vmul.f32 %v1250, 1.442695
    %v1253 = vpow.pop %v1252
    %v1254 = vmul.f32 %v1251, 1.442695
    %v1255 = vpow.pop %v1254
    %1256 = vadd.xlane.f32.xlu0 %v1253
    %v1257 = vpop.xlane.xlu0 %1256
    %1258 = vadd.xlane.f32.xlu0 %v1255
    %v1259 = vpop.xlane.xlu0 %1258
    %v1260 = vlog2.pop %v1257
    %v1261 = vmul.f32 %v1260, 0.6931472
    %v1262 = vlog2.pop %v1259
    %v1263 = vmul.f32 %v1262, 0.6931472
    %v1264 = vadd.f32 %v1247, %v1261
    %v1265 = vadd.f32 %v1249, %v1263
    %1266 = vset.pattern.permute.xlu0 5
    %1267 = vperm.xlu0 %1266, %v834
    %v1268 = vpop.permute.xlu0 %1267
    %1269 = vset.pattern.permute.xlu0 5
    %1270 = vperm.xlu0 %1269, %v835
    %v1271 = vpop.permute.xlu0 %1270
    %vm1272 = vcmp.eq.s32.totalorder %v47, %v1268
    %vm1273 = vcmp.eq.s32.totalorder %v47, %v1271
    %v1274 = vsel %vm1272, %v674, 0.0
    %v1275 = vsel %vm1273, %v680, 0.0
    %1276 = vadd.xlane.f32.xlu0 %v1274
    %v1277 = vpop.xlane.xlu0 %1276
    %1278 = vadd.xlane.f32.xlu0 %v1275
    %v1279 = vpop.xlane.xlu0 %1278
    %v1280 = vsub.f32 %v1264, %v1277
    %v1281 = vsub.f32 %v1265, %v1279
    %v1282 = vmul.f32 %v1280, %v836
    %v1283 = vmul.f32 %v1281, %v837
    %1286 = vrot.lane.b32.xlu0 %v1282, 123
    %v1287 = vpop.permute.xlu0 %1286
    %1288 = vrot.lane.b32.xlu0 %v1283, 123
    %v1289 = vpop.permute.xlu0 %1288
    %v1292 = vsel %vm878, %v1287, 0.0
    %v1293 = vsel %vm878, %v1289, 0.0
    %v1294 = vadd.f32 %v1292, %v1293
    %1295 = vadd.xlane.f32.xlu0 %v1294
    %v1296 = vpop.xlane.xlu0 %1295
    %v1297 = vrot.slane %v1296, 4
    %v1298 = vadd.f32 %v1296, %v1297
    %v1299 = vrot.slane %v1298, 2
    %v1300 = vadd.f32 %v1298, %v1299
    %v1301 = vrot.slane %v1300, 1
    %v1302 = vadd.f32 %v1300, %v1301
    %s1303 = vtos %v1302
    %1304 = vrot.lane.b32.xlu0 %v836, 123
    %v1305 = vpop.permute.xlu0 %1304
    %1306 = vrot.lane.b32.xlu0 %v837, 123
    %v1307 = vpop.permute.xlu0 %1306
    %v1310 = vsel %vm878, %v1305, 0.0
    %v1311 = vsel %vm878, %v1307, 0.0
    %v1312 = vadd.f32 %v1310, %v1311
    %1313 = vadd.xlane.f32.xlu0 %v1312
    %v1314 = vpop.xlane.xlu0 %1313
    %v1315 = vrot.slane %v1314, 4
    %v1316 = vadd.f32 %v1314, %v1315
    %v1317 = vrot.slane %v1316, 2
    %v1318 = vadd.f32 %v1316, %v1317
    %v1319 = vrot.slane %v1318, 1
    %v1320 = vadd.f32 %v1318, %v1319
    %s1321 = vtos %v1320
    %vm1322 = vcmp.eq.s32.totalorder %v47, 5
    %vm1323 = vmand %vm903, %vm1322
    %v1324 = vstv %s1303
    %v1325 = vsel %vm1323, %v1324, %v1245
    %vm1326 = vmand %vm908, %vm1322
    %v1327 = vstv %s1321
    %v1328 = vsel %vm1326, %v1327, %v1325
    %1329 = vmax.xlane.f32.xlu0 %v749
    %v1330 = vpop.xlane.xlu0 %1329
    %1331 = vmax.xlane.f32.xlu0 %v755
    %v1332 = vpop.xlane.xlu0 %1331
    %v1333 = vsub.f32 %v749, %v1330
    %v1334 = vsub.f32 %v755, %v1332
    %v1335 = vmul.f32 %v1333, 1.442695
    %v1336 = vpow.pop %v1335
    %v1337 = vmul.f32 %v1334, 1.442695
    %v1338 = vpow.pop %v1337
    %1339 = vadd.xlane.f32.xlu0 %v1336
    %v1340 = vpop.xlane.xlu0 %1339
    %1341 = vadd.xlane.f32.xlu0 %v1338
    %v1342 = vpop.xlane.xlu0 %1341
    %v1343 = vlog2.pop %v1340
    %v1344 = vmul.f32 %v1343, 0.6931472
    %v1345 = vlog2.pop %v1342
    %v1346 = vmul.f32 %v1345, 0.6931472
    %v1347 = vadd.f32 %v1330, %v1344
    %v1348 = vadd.f32 %v1332, %v1346
    %1349 = vset.pattern.permute.xlu0 6
    %1350 = vperm.xlu0 %1349, %v834
    %v1351 = vpop.permute.xlu0 %1350
    %1352 = vset.pattern.permute.xlu0 6
    %1353 = vperm.xlu0 %1352, %v835
    %v1354 = vpop.permute.xlu0 %1353
    %vm1355 = vcmp.eq.s32.totalorder %v47, %v1351
    %vm1356 = vcmp.eq.s32.totalorder %v47, %v1354
    %v1357 = vsel %vm1355, %v749, 0.0
    %v1358 = vsel %vm1356, %v755, 0.0
    %1359 = vadd.xlane.f32.xlu0 %v1357
    %v1360 = vpop.xlane.xlu0 %1359
    %1361 = vadd.xlane.f32.xlu0 %v1358
    %v1362 = vpop.xlane.xlu0 %1361
    %v1363 = vsub.f32 %v1347, %v1360
    %v1364 = vsub.f32 %v1348, %v1362
    %v1365 = vmul.f32 %v1363, %v836
    %v1366 = vmul.f32 %v1364, %v837
    %1369 = vrot.lane.b32.xlu0 %v1365, 122
    %v1370 = vpop.permute.xlu0 %1369
    %1371 = vrot.lane.b32.xlu0 %v1366, 122
    %v1372 = vpop.permute.xlu0 %1371
    %v1375 = vsel %vm878, %v1370, 0.0
    %v1376 = vsel %vm878, %v1372, 0.0
    %v1377 = vadd.f32 %v1375, %v1376
    %1378 = vadd.xlane.f32.xlu0 %v1377
    %v1379 = vpop.xlane.xlu0 %1378
    %v1380 = vrot.slane %v1379, 4
    %v1381 = vadd.f32 %v1379, %v1380
    %v1382 = vrot.slane %v1381, 2
    %v1383 = vadd.f32 %v1381, %v1382
    %v1384 = vrot.slane %v1383, 1
    %v1385 = vadd.f32 %v1383, %v1384
    %s1386 = vtos %v1385
    %1387 = vrot.lane.b32.xlu0 %v836, 122
    %v1388 = vpop.permute.xlu0 %1387
    %1389 = vrot.lane.b32.xlu0 %v837, 122
    %v1390 = vpop.permute.xlu0 %1389
    %v1393 = vsel %vm878, %v1388, 0.0
    %v1394 = vsel %vm878, %v1390, 0.0
    %v1395 = vadd.f32 %v1393, %v1394
    %1396 = vadd.xlane.f32.xlu0 %v1395
    %v1397 = vpop.xlane.xlu0 %1396
    %v1398 = vrot.slane %v1397, 4
    %v1399 = vadd.f32 %v1397, %v1398
    %v1400 = vrot.slane %v1399, 2
    %v1401 = vadd.f32 %v1399, %v1400
    %v1402 = vrot.slane %v1401, 1
    %v1403 = vadd.f32 %v1401, %v1402
    %s1404 = vtos %v1403
    %vm1405 = vcmp.eq.s32.totalorder %v47, 6
    %vm1406 = vmand %vm903, %vm1405
    %v1407 = vstv %s1386
    %v1408 = vsel %vm1406, %v1407, %v1328
    %vm1409 = vmand %vm908, %vm1405
    %v1410 = vstv %s1404
    %v1411 = vsel %vm1409, %v1410, %v1408
    %1412 = vmax.xlane.f32.xlu0 %v751
    %v1413 = vpop.xlane.xlu0 %1412
    %1414 = vmax.xlane.f32.xlu0 %v757
    %v1415 = vpop.xlane.xlu0 %1414
    %v1416 = vsub.f32 %v751, %v1413
    %v1417 = vsub.f32 %v757, %v1415
    %v1418 = vmul.f32 %v1416, 1.442695
    %v1419 = vpow.pop %v1418
    %v1420 = vmul.f32 %v1417, 1.442695
    %v1421 = vpow.pop %v1420
    %1422 = vadd.xlane.f32.xlu0 %v1419
    %v1423 = vpop.xlane.xlu0 %1422
    %1424 = vadd.xlane.f32.xlu0 %v1421
    %v1425 = vpop.xlane.xlu0 %1424
    %v1426 = vlog2.pop %v1423
    %v1427 = vmul.f32 %v1426, 0.6931472
    %v1428 = vlog2.pop %v1425
    %v1429 = vmul.f32 %v1428, 0.6931472
    %v1430 = vadd.f32 %v1413, %v1427
    %v1431 = vadd.f32 %v1415, %v1429
    %1432 = vset.pattern.permute.xlu0 7
    %1433 = vperm.xlu0 %1432, %v834
    %v1434 = vpop.permute.xlu0 %1433
    %1435 = vset.pattern.permute.xlu0 7
    %1436 = vperm.xlu0 %1435, %v835
    %v1437 = vpop.permute.xlu0 %1436
    %vm1438 = vcmp.eq.s32.totalorder %v47, %v1434
    %vm1439 = vcmp.eq.s32.totalorder %v47, %v1437
    %v1440 = vsel %vm1438, %v751, 0.0
    %v1441 = vsel %vm1439, %v757, 0.0
    %1442 = vadd.xlane.f32.xlu0 %v1440
    %v1443 = vpop.xlane.xlu0 %1442
    %1444 = vadd.xlane.f32.xlu0 %v1441
    %v1445 = vpop.xlane.xlu0 %1444
    %v1446 = vsub.f32 %v1430, %v1443
    %v1447 = vsub.f32 %v1431, %v1445
    %v1448 = vmul.f32 %v1446, %v836
    %v1449 = vmul.f32 %v1447, %v837
    %1452 = vrot.lane.b32.xlu0 %v1448, 121
    %v1453 = vpop.permute.xlu0 %1452
    %1454 = vrot.lane.b32.xlu0 %v1449, 121
    %v1455 = vpop.permute.xlu0 %1454
    %v1458 = vsel %vm878, %v1453, 0.0
    %v1459 = vsel %vm878, %v1455, 0.0
    %v1460 = vadd.f32 %v1458, %v1459
    %1461 = vadd.xlane.f32.xlu0 %v1460
    %v1462 = vpop.xlane.xlu0 %1461
    %v1463 = vrot.slane %v1462, 4
    %v1464 = vadd.f32 %v1462, %v1463
    %v1465 = vrot.slane %v1464, 2
    %v1466 = vadd.f32 %v1464, %v1465
    %v1467 = vrot.slane %v1466, 1
    %v1468 = vadd.f32 %v1466, %v1467
    %s1469 = vtos %v1468
    %1470 = vrot.lane.b32.xlu0 %v836, 121
    %v1471 = vpop.permute.xlu0 %1470
    %1472 = vrot.lane.b32.xlu0 %v837, 121
    %v1473 = vpop.permute.xlu0 %1472
    %v1476 = vsel %vm878, %v1471, 0.0
    %v1477 = vsel %vm878, %v1473, 0.0
    %v1478 = vadd.f32 %v1476, %v1477
    %1479 = vadd.xlane.f32.xlu0 %v1478
    %v1480 = vpop.xlane.xlu0 %1479
    %v1481 = vrot.slane %v1480, 4
    %v1482 = vadd.f32 %v1480, %v1481
    %v1483 = vrot.slane %v1482, 2
    %v1484 = vadd.f32 %v1482, %v1483
    %v1485 = vrot.slane %v1484, 1
    %v1486 = vadd.f32 %v1484, %v1485
    %s1487 = vtos %v1486
    %vm1488 = vcmp.eq.s32.totalorder %v47, 7
    %vm1489 = vmand %vm903, %vm1488
    %v1490 = vstv %s1469
    %v1491 = vsel %vm1489, %v1490, %v1411
    %vm1492 = vmand %vm908, %vm1488
    %v1493 = vstv %s1487
    %v1494 = vsel %vm1492, %v1493, %v1491
    %1495 = vmax.xlane.f32.xlu0 %v826
    %v1496 = vpop.xlane.xlu0 %1495
    %1497 = vmax.xlane.f32.xlu0 %v831
    %v1498 = vpop.xlane.xlu0 %1497
    %v1499 = vsub.f32 %v826, %v1496
    %v1500 = vsub.f32 %v831, %v1498
    %v1501 = vmul.f32 %v1499, 1.442695
    %v1502 = vpow.pop %v1501
    %v1503 = vmul.f32 %v1500, 1.442695
    %v1504 = vpow.pop %v1503
    %1505 = vadd.xlane.f32.xlu0 %v1502
    %v1506 = vpop.xlane.xlu0 %1505
    %1507 = vadd.xlane.f32.xlu0 %v1504
    %v1508 = vpop.xlane.xlu0 %1507
    %v1509 = vlog2.pop %v1506
    %v1510 = vmul.f32 %v1509, 0.6931472
    %v1511 = vlog2.pop %v1508
    %v1512 = vmul.f32 %v1511, 0.6931472
    %v1513 = vadd.f32 %v1496, %v1510
    %v1514 = vadd.f32 %v1498, %v1512
    %1515 = vset.pattern.permute.xlu0 8
    %1516 = vperm.xlu0 %1515, %v834
    %v1517 = vpop.permute.xlu0 %1516
    %1518 = vset.pattern.permute.xlu0 8
    %1519 = vperm.xlu0 %1518, %v835
    %v1520 = vpop.permute.xlu0 %1519
    %vm1521 = vcmp.eq.s32.totalorder %v47, %v1517
    %vm1522 = vcmp.eq.s32.totalorder %v47, %v1520
    %v1523 = vsel %vm1521, %v826, 0.0
    %v1524 = vsel %vm1522, %v831, 0.0
    %1525 = vadd.xlane.f32.xlu0 %v1523
    %v1526 = vpop.xlane.xlu0 %1525
    %1527 = vadd.xlane.f32.xlu0 %v1524
    %v1528 = vpop.xlane.xlu0 %1527
    %v1529 = vsub.f32 %v1513, %v1526
    %v1530 = vsub.f32 %v1514, %v1528
    %v1531 = vmul.f32 %v1529, %v836
    %v1532 = vmul.f32 %v1530, %v837
    %1535 = vrot.lane.b32.xlu0 %v1531, 120
    %v1536 = vpop.permute.xlu0 %1535
    %1537 = vrot.lane.b32.xlu0 %v1532, 120
    %v1538 = vpop.permute.xlu0 %1537
    %v1541 = vsel %vm878, %v1536, 0.0
    %v1542 = vsel %vm878, %v1538, 0.0
    %v1543 = vadd.f32 %v1541, %v1542
    %1544 = vadd.xlane.f32.xlu0 %v1543
    %v1545 = vpop.xlane.xlu0 %1544
    %v1546 = vrot.slane %v1545, 4
    %v1547 = vadd.f32 %v1545, %v1546
    %v1548 = vrot.slane %v1547, 2
    %v1549 = vadd.f32 %v1547, %v1548
    %v1550 = vrot.slane %v1549, 1
    %v1551 = vadd.f32 %v1549, %v1550
    %s1552 = vtos %v1551
    %1553 = vrot.lane.b32.xlu0 %v836, 120
    %v1554 = vpop.permute.xlu0 %1553
    %1555 = vrot.lane.b32.xlu0 %v837, 120
    %v1556 = vpop.permute.xlu0 %1555
    %v1559 = vsel %vm878, %v1554, 0.0
    %v1560 = vsel %vm878, %v1556, 0.0
    %v1561 = vadd.f32 %v1559, %v1560
    %1562 = vadd.xlane.f32.xlu0 %v1561
    %v1563 = vpop.xlane.xlu0 %1562
    %v1564 = vrot.slane %v1563, 4
    %v1565 = vadd.f32 %v1563, %v1564
    %v1566 = vrot.slane %v1565, 2
    %v1567 = vadd.f32 %v1565, %v1566
    %v1568 = vrot.slane %v1567, 1
    %v1569 = vadd.f32 %v1567, %v1568
    %s1570 = vtos %v1569
    %vm1571 = vcmp.eq.s32.totalorder %v47, 8
    %vm1572 = vmand %vm903, %vm1571
    %v1573 = vstv %s1552
    %v1574 = vsel %vm1572, %v1573, %v1494
    %vm1575 = vmand %vm908, %vm1571
    %v1576 = vstv %s1570
    %v1577 = vsel %vm1575, %v1576, %v1574
    %1578 = vst [vmem:[#allocation5] sm:$0xff] %v1577
    // Predicated region
    $region38: #{tpu_custom_call.1} parent=1 // pred_check
      _
    $region39: #{tpu_custom_call.1} parent=1 // pred_check_branch
      %1580 = sbr.rel (0) target = $region41
    $region40: #{tpu_custom_call.1} parent=1 // pred_region
      %s1582 = ssub.s32 128, 128
      %1583 = vsyncadd [#allocation4], %s1582
      %s1585 = sshll.u32 [#allocation5], 4
      %s1586 = int_to_ptr.vmem [resolvable:$true] %s1585
      %1588 = dma.vmem_to_hbm [thread:$0]  %s1586, 128, %s8, [#allocation4]
    $region41: #{tpu_custom_call.1} parent=1 // pred_fallthru
      _
    // Predicated region
    $region42: #{tpu_custom_call.1} parent=1 // pred_check
      _
    $region43: #{tpu_custom_call.1} parent=1 // pred_check_branch
      %1590 = sbr.rel (0) target = $region45
    $region44: #{tpu_custom_call.1} parent=1 // pred_region
      %1591 = dma.done [#allocation4], 128
    $region45: #{tpu_custom_call.1} parent=1 // pred_fallthru
      _
    %1592 = vsyncpa [#allocation3], 1
    %1593 = vsyncpa [#allocation4], 1

</llo_original>
